<compile_context>
chip_gen: v5e
topology: v5e:2x2
jax: 0.10.0
libtpu: 0.0.40
codegen_flags: <defaults>
</compile_context>

<pallas_src>
import functools
from math import sqrt, pi, prod

import jax
import jax.numpy as jnp
from jax.experimental import pallas as pl
from jax.experimental.pallas import tpu as pltpu

LN_EPS = 1e-5          # GPT-2 layer_norm_epsilon
NEG_INF = -1e30        # f32-safe additive mask sentinel (never cast to bf16)


# ----------------------------- in-kernel math ------------------------------
def _layer_norm(x, g, b, eps=LN_EPS):
    mu = jnp.mean(x, axis=-1, keepdims=True)
    var = jnp.mean((x - mu) ** 2, axis=-1, keepdims=True)
    return (x - mu) * jax.lax.rsqrt(var + eps) * g + b


def _gelu_new(x):
    c = sqrt(2.0 / pi)
    return 0.5 * x * (1.0 + jnp.tanh(c * (x + 0.044715 * x * x * x)))


# --------------------------- fused backbone kernel ---------------------------
def encoder_kernel(x_ref, wpe_ref, bias_ref,
                   ln1_g, ln1_b, w_qkv, b_qkv, w_ao, b_ao,
                   ln2_g, ln2_b, w_fc, b_fc, w_pr, b_pr,
                   lnf_g, lnf_b,
                   o_ref, x_scr,
                   *, seq, d_model, n_head, n_layer, bb, t_attn, ffn_chunk):
    """One (batch_block, layer) grid step: apply GPT-2 block `l` to Bb elements."""
    l = pl.program_id(1)
    dh = d_model // n_head
    m_rows = bb * seq
    scale = jnp.float32(1.0 / sqrt(dh))
    n_qt = seq // t_attn
    n_fc = (4 * d_model) // ffn_chunk

    # first layer: load hidden state (bf16 -> f32) + fused positional-embedding add
    @pl.when(l == 0)
    def _():
        x_scr[...] = (x_ref[...].astype(jnp.float32)
                      + wpe_ref[...].astype(jnp.float32)[None])

    x = x_scr[...]                                   # (Bb, S, D) f32
    xf = x.reshape(m_rows, d_model)                  # flat rows for all projections

    # ---------------- causal multi-head self-attention ----------------
    h = _layer_norm(xf, ln1_g[0], ln1_b[0])
    qkv = jnp.dot(h.astype(jnp.bfloat16), w_qkv[0],
                  preferred_element_type=jnp.float32) + b_qkv[0]      # (M, 3D) f32

    # fold softmax scale into q in f32 before the bf16 cast (S*D muls, not H*S^2)
    q_all = qkv[:, :d_model] * scale
    k_all = qkv[:, d_model:2 * d_model]
    v_all = qkv[:, 2 * d_model:]

    bias = bias_ref[...]                             # (Tq, Tk) additive causal bias

    attn_rows = []
    for bi in range(bb):                             # attention is per batch element
        r0, r1 = bi * seq, (bi + 1) * seq

        def heads_of(t2d):                           # (S, D) -> (H, S, dh)
            return jnp.stack(
                [t2d[:, hh * dh:(hh + 1) * dh] for hh in range(n_head)], axis=0)

        qh = heads_of(q_all[r0:r1]).astype(jnp.bfloat16)
        kh = heads_of(k_all[r0:r1]).astype(jnp.bfloat16)
        vh = heads_of(v_all[r0:r1]).astype(jnp.bfloat16)

        q_out = []
        for qi in range(n_qt):                       # flash-style Q tiles
            q_t = qh[:, qi * t_attn:(qi + 1) * t_attn, :]          # (H, Tq, dh)
            m_i = jnp.full((n_head, t_attn, 1), NEG_INF, jnp.float32)
            l_i = jnp.zeros((n_head, t_attn, 1), jnp.float32)
            acc = jnp.zeros((n_head, t_attn, dh), jnp.float32)
            for ki in range(qi + 1):                 # causal block-skip: ki <= qi only
                k_t = kh[:, ki * t_attn:(ki + 1) * t_attn, :]
                v_t = vh[:, ki * t_attn:(ki + 1) * t_attn, :]
                s = jnp.einsum("hqd,hkd->hqk", q_t, k_t,
                               preferred_element_type=jnp.float32)  # (H, Tq, Tk) f32
                if ki == qi:                         # mask only the diagonal tile
                    s = s + bias[None]
                m_new = jnp.maximum(m_i, jnp.max(s, axis=-1, keepdims=True))
                alpha = jnp.exp(m_i - m_new)
                p = jnp.exp(s - m_new)
                l_i = alpha * l_i + jnp.sum(p, axis=-1, keepdims=True)
                acc = alpha * acc + jnp.einsum(
                    "hqk,hkd->hqd", p.astype(jnp.bfloat16), v_t,
                    preferred_element_type=jnp.float32)
                m_i = m_new
            ctx = acc * pl.reciprocal(l_i, approx=True)            # (H, Tq, dh)
            q_out.append(jnp.concatenate(
                [ctx[hh] for hh in range(n_head)], axis=-1))       # (Tq, D)
        attn_rows.append(jnp.concatenate(q_out, axis=0))           # (S, D)

    attn = jnp.concatenate(attn_rows, axis=0)                      # (M, D) f32
    attn = jnp.dot(attn.astype(jnp.bfloat16), w_ao[0],
                   preferred_element_type=jnp.float32) + b_ao[0]
    xf = xf + attn                                                 # residual (f32)

    # ------------------------------- MLP (ffn-chunked) -------------------------------
    h2 = _layer_norm(xf, ln2_g[0], ln2_b[0]).astype(jnp.bfloat16)
    wfc = w_fc[0]                       # (D, 4D) bf16, resident VMEM block
    wpr = w_pr[0]                       # (4D, D) bf16
    bfc = b_fc[0]                       # (1, 4D) f32
    mlp = jnp.zeros((m_rows, d_model), jnp.float32)
    for c in range(n_fc):               # never materialize the full (M, 4D) f32 gelu
        c0, c1 = c * ffn_chunk, (c + 1) * ffn_chunk
        u = jnp.dot(h2, wfc[:, c0:c1],
                    preferred_element_type=jnp.float32) + bfc[:, c0:c1]
        u = _gelu_new(u)                                           # f32 gelu
        mlp = mlp + jnp.dot(u.astype(jnp.bfloat16), wpr[c0:c1, :],
                            preferred_element_type=jnp.float32)
    xf = xf + mlp + b_pr[0]                                        # residual (f32)

    x_scr[...] = xf.reshape(bb, seq, d_model)                      # carry to next layer

    # last layer: fused final layernorm + single HBM writeback per batch block
    @pl.when(l == n_layer - 1)
    def _():
        o_ref[...] = _layer_norm(xf, lnf_g[...], lnf_b[...]) \
            .reshape(bb, seq, d_model).astype(o_ref.dtype)


# ----------------------------- wrappers -------------------------------------
_LAYER_KEYS = ["ln1_g", "ln1_b", "w_qkv", "b_qkv", "w_ao", "b_ao",
               "ln2_g", "ln2_b", "w_fc", "b_fc", "w_pr", "b_pr"]
_MATMUL_KEYS = {"w_qkv", "w_ao", "w_fc", "w_pr"}


def stack_layer_params(params, weight_dtype=jnp.bfloat16):
    """Stack per-layer params on a leading layer axis; matmul weights -> bf16."""
    layers = params["layers"]
    out = {}
    for k in _LAYER_KEYS:
        a = jnp.stack([L[k] for L in layers], axis=0)
        if k in _MATMUL_KEYS:
            a = a.astype(weight_dtype)
        out[k] = a
    return out


def _full_spec(arr):
    n = arr.ndim
    return pl.BlockSpec(arr.shape, lambda i, l, _n=n: (0,) * _n)


def _layer_spec(arr):
    n = arr.ndim
    return pl.BlockSpec((1,) + arr.shape[1:],
                        lambda i, l, _n=n: (l,) + (0,) * (_n - 1))


def _nbytes(shape, dtype):
    return int(prod(shape)) * jnp.dtype(dtype).itemsize


def _pick_tile(total, candidates):
    for c in candidates:
        if c <= total and total % c == 0:
            return c
    return total


def _vmem_capacity_bytes(default=64 << 20):
    """Real per-core VMEM (v7x: 64 MiB, v5e/v6e: 128 MiB); safe default = 64 MiB."""
    try:
        info = pltpu.get_tpu_info()
        for name in ("vmem_capacity_bytes", "vmem_bytes", "vmem_size_bytes"):
            v = getattr(info, name, None)
            if v:
                return int(v)
    except Exception:
        pass
    return default


def server_encoder_forward(embeds, params, *, n_head, batch_block=None):
    """ServerEncoder.forward: backbone(inputs_embeds=embeds) -> last hidden state."""
    B, S, D = embeds.shape
    n_layer = len(params["layers"])
    stacked = stack_layer_params(params)
    wpe = params["wpe"][:S]                          # (S, D)
    lnf_g, lnf_b = params["lnf_g"], params["lnf_b"]
    weight_args = [stacked[k] for k in _LAYER_KEYS]

    # batch blocking: larger Bb => weights DMA'd fewer times (bandwidth win,
    # most important on v5e); smaller Bb => more "parallel" grid steps for megacore.
    if batch_block is None:
        batch_block = _pick_tile(B, (4, 2))
    assert B % batch_block == 0, "batch must be divisible by batch_block"
    nb = B // batch_block

    # Q/K tile (Tq == Tk, multiple of 256 at production S per MXU-feed guidance).
    t_attn = _pick_tile(S, (256, 512, 128))
    # ffn chunk over the 4D axis (caps the f32 gelu intermediate).
    ffn_chunk = _pick_tile(4 * D, (2048, 1024, 512))

    # precomputed additive causal bias for the diagonal K tile (f32-safe -1e30)
    r = jax.lax.broadcasted_iota(jnp.int32, (t_attn, t_attn), 0)
    c = jax.lax.broadcasted_iota(jnp.int32, (t_attn, t_attn), 1)
    causal_bias = jnp.where(c <= r, 0.0, NEG_INF).astype(jnp.float32)

    # explicit VMEM budget, capped by the real device capacity (legal on v7x).
    m_rows = batch_block * S
    per_layer_w = sum(_nbytes(a.shape[1:], a.dtype) for a in weight_args)
    act = _nbytes((m_rows, D), jnp.float32)
    resident = (2 * per_layer_w                                   # dbl-buffered weights
                + 2 * _nbytes((batch_block, S, D), jnp.bfloat16)  # dbl-buffered input
                + 2 * _nbytes((batch_block, S, D), jnp.float32)   # dbl-buffered output
                + _nbytes((batch_block, S, D), jnp.float32)       # hidden-state scratch
                + _nbytes(wpe.shape, wpe.dtype)
                + _nbytes((t_attn, t_attn), jnp.float32))
    temps = (_nbytes((m_rows, 3 * D), jnp.float32)
             + _nbytes((m_rows, ffn_chunk), jnp.float32)
             + 4 * _nbytes((n_head, t_attn, t_attn), jnp.float32)
             + 8 * act)
    est = resident + temps
    budget = int(0.85 * _vmem_capacity_bytes())
    vmem_limit = int(min(max(int(est * 1.5), 32 << 20), budget))

    kernel = functools.partial(encoder_kernel, seq=S, d_model=D, n_head=n_head,
                               n_layer=n_layer, bb=batch_block,
                               t_attn=t_attn, ffn_chunk=ffn_chunk)

    in_specs = ([pl.BlockSpec((batch_block, S, D), lambda i, l: (i, 0, 0)),  # hidden in
                 _full_spec(wpe),
                 _full_spec(causal_bias)]
                + [_layer_spec(a) for a in weight_args]          # streamed per layer
                + [_full_spec(lnf_g), _full_spec(lnf_b)])

    return pl.pallas_call(
        kernel,
        out_shape=jax.ShapeDtypeStruct((B, S, D), jnp.float32),
        grid_spec=pltpu.PrefetchScalarGridSpec(
            num_scalar_prefetch=0,
            grid=(nb, n_layer),                      # layer axis innermost (carry)
            in_specs=in_specs,
            out_specs=pl.BlockSpec((batch_block, S, D), lambda i, l: (i, 0, 0)),
            scratch_shapes=[pltpu.VMEM((batch_block, S, D), jnp.float32)]),
        compiler_params=pltpu.CompilerParams(
            dimension_semantics=("parallel", "arbitrary"),
            vmem_limit_bytes=vmem_limit),
    )(embeds.astype(jnp.bfloat16), wpe, causal_bias, *weight_args, lnf_g, lnf_b)


# --------------------------- parameter init ---------------------------------
def init_params(key, *, n_layer, d_model, max_pos):
    layers = []
    for i in range(n_layer):
        k = jax.random.fold_in(key, i)
        ks = jax.random.split(k, 8)
        layers.append(dict(
            ln1_g=jnp.ones((1, d_model), jnp.float32),
            ln1_b=jnp.zeros((1, d_model), jnp.float32),
            w_qkv=0.02 * jax.random.normal(ks[0], (d_model, 3 * d_model), jnp.float32),
            b_qkv=0.01 * jax.random.normal(ks[1], (1, 3 * d_model), jnp.float32),
            w_ao=0.02 * jax.random.normal(ks[2], (d_model, d_model), jnp.float32),
            b_ao=0.01 * jax.random.normal(ks[3], (1, d_model), jnp.float32),
            ln2_g=jnp.ones((1, d_model), jnp.float32),
            ln2_b=jnp.zeros((1, d_model), jnp.float32),
            w_fc=0.02 * jax.random.normal(ks[4], (d_model, 4 * d_model), jnp.float32),
            b_fc=0.01 * jax.random.normal(ks[5], (1, 4 * d_model), jnp.float32),
            w_pr=0.02 * jax.random.normal(ks[6], (4 * d_model, d_model), jnp.float32),
            b_pr=0.01 * jax.random.normal(ks[7], (1, d_model), jnp.float32),
        ))
    kw = jax.random.fold_in(key, 1000)
    return dict(
        wpe=0.02 * jax.random.normal(kw, (max_pos, d_model), jnp.float32),
        layers=layers,
        lnf_g=jnp.ones((1, d_model), jnp.float32),
        lnf_b=jnp.zeros((1, d_model), jnp.float32),
    )


# --------------------------- pure-JAX reference ------------------------------
def reference_forward(embeds, params, *, n_head):
    hp = jax.lax.Precision.HIGHEST
    B, S, D = embeds.shape
    dh = D // n_head
    x = embeds.astype(jnp.float32) + params["wpe"][None, :S, :]
    causal = jnp.tril(jnp.ones((S, S), bool))
    for L in params["layers"]:
        h = _layer_norm(x, L["ln1_g"], L["ln1_b"])
        qkv = jnp.einsum("bsd,df->bsf", h, L["w_qkv"], precision=hp) + L["b_qkv"]
        q, k, v = jnp.split(qkv, 3, axis=-1)
        q = q.reshape(B, S, n_head, dh).transpose(0, 2, 1, 3)
        k = k.reshape(B, S, n_head, dh).transpose(0, 2, 1, 3)
        v = v.reshape(B, S, n_head, dh).transpose(0, 2, 1, 3)
        s = jnp.einsum("bhqd,bhkd->bhqk", q, k, precision=hp) / sqrt(dh)
        s = jnp.where(causal[None, None], s, -1e30)
        p = jax.nn.softmax(s, axis=-1)
        a = jnp.einsum("bhqk,bhkd->bhqd", p, v, precision=hp)
        a = a.transpose(0, 2, 1, 3).reshape(B, S, D)
        a = jnp.einsum("bsd,df->bsf", a, L["w_ao"], precision=hp) + L["b_ao"]
        x = x + a
        h2 = _layer_norm(x, L["ln2_g"], L["ln2_b"])
        u = _gelu_new(jnp.einsum("bsd,df->bsf", h2, L["w_fc"], precision=hp) + L["b_fc"])
        m = jnp.einsum("bsf,fd->bsd", u, L["w_pr"], precision=hp) + L["b_pr"]
        x = x + m
    return _layer_norm(x, params["lnf_g"], params["lnf_b"])


# ------------------------------- main ----------------------------------------
if __name__ == "__main__":
    B, S, D, H, N_LAYER = 2, 8, 32, 4, 2      # small GPT-2-style config

    key = jax.random.PRNGKey(0)
    k_emb, k_par = jax.random.split(key)
    embeds = jax.random.normal(k_emb, (B, S, D), jnp.float32)
    params = init_params(k_par, n_layer=N_LAYER, d_model=D, max_pos=S)

    out = server_encoder_forward(embeds, params, n_head=H)
    out = jax.block_until_ready(out)

    ref = jax.block_until_ready(reference_forward(embeds, params, n_head=H))
    assert out.shape == (B, S, D) and out.dtype == jnp.float32
    # bf16 embeds/weights + approx reciprocal => looser tolerance than pure f32
    assert jnp.allclose(out, ref, atol=3e-2, rtol=3e-2), \
        f"max err {jnp.max(jnp.abs(out - ref))}"

    print("KERNEL_OK")
</pallas_src>

<mosaic_0001>
module attributes {stable_mosaic.version = 11 : i64} {
  func.func @encoder_kernel(%arg0: i32, %arg1: i32, %arg2: memref<2x8x32xbf16, #tpu.memory_space<vmem>>, %arg3: memref<8x32xf32, #tpu.memory_space<vmem>>, %arg4: memref<8x8xf32, #tpu.memory_space<vmem>>, %arg5: memref<1x1x32xf32, #tpu.memory_space<vmem>>, %arg6: memref<1x1x32xf32, #tpu.memory_space<vmem>>, %arg7: memref<1x32x96xbf16, #tpu.memory_space<vmem>>, %arg8: memref<1x1x96xf32, #tpu.memory_space<vmem>>, %arg9: memref<1x32x32xbf16, #tpu.memory_space<vmem>>, %arg10: memref<1x1x32xf32, #tpu.memory_space<vmem>>, %arg11: memref<1x1x32xf32, #tpu.memory_space<vmem>>, %arg12: memref<1x1x32xf32, #tpu.memory_space<vmem>>, %arg13: memref<1x32x128xbf16, #tpu.memory_space<vmem>>, %arg14: memref<1x1x128xf32, #tpu.memory_space<vmem>>, %arg15: memref<1x128x32xbf16, #tpu.memory_space<vmem>>, %arg16: memref<1x1x32xf32, #tpu.memory_space<vmem>>, %arg17: memref<1x32xf32, #tpu.memory_space<vmem>>, %arg18: memref<1x32xf32, #tpu.memory_space<vmem>>, %arg19: memref<2x8x32xf32, #tpu.memory_space<vmem>>, %arg20: memref<2x8x32xf32, #tpu.memory_space<vmem>>) attributes {dimension_semantics = [#tpu.dimension_semantics<parallel>, #tpu.dimension_semantics<arbitrary>], iteration_bounds = array<i64: 1, 2>, scalar_prefetch = 0 : i64, scratch_operands = 1 : i64, tpu.core_type = #tpu.core_type<tc>, window_params = [{transform_indices = @transform_0, window_bounds = array<i64: 2, 8, 32>}, {pipeline_mode = #tpu.pipeline_mode<synchronous>, transform_indices = @transform_1, window_bounds = array<i64: 8, 32>}, {pipeline_mode = #tpu.pipeline_mode<synchronous>, transform_indices = @transform_2, window_bounds = array<i64: 8, 8>}, {transform_indices = @transform_3, window_bounds = array<i64: 1, 1, 32>}, {transform_indices = @transform_4, window_bounds = array<i64: 1, 1, 32>}, {transform_indices = @transform_5, window_bounds = array<i64: 1, 32, 96>}, {transform_indices = @transform_6, window_bounds = array<i64: 1, 1, 96>}, {transform_indices = @transform_7, window_bounds = array<i64: 1, 32, 32>}, {transform_indices = @transform_8, window_bounds = array<i64: 1, 1, 32>}, {transform_indices = @transform_9, window_bounds = array<i64: 1, 1, 32>}, {transform_indices = @transform_10, window_bounds = array<i64: 1, 1, 32>}, {transform_indices = @transform_11, window_bounds = array<i64: 1, 32, 128>}, {transform_indices = @transform_12, window_bounds = array<i64: 1, 1, 128>}, {transform_indices = @transform_13, window_bounds = array<i64: 1, 128, 32>}, {transform_indices = @transform_14, window_bounds = array<i64: 1, 1, 32>}, {pipeline_mode = #tpu.pipeline_mode<synchronous>, transform_indices = @transform_15, window_bounds = array<i64: 1, 32>}, {pipeline_mode = #tpu.pipeline_mode<synchronous>, transform_indices = @transform_16, window_bounds = array<i64: 1, 32>}, {transform_indices = @transform_17, window_bounds = array<i64: 2, 8, 32>}]} {
    %c0_i32 = arith.constant 0 : i32
    %0 = arith.cmpi eq, %arg1, %c0_i32 : i32
    %1 = arith.extui %0 : i1 to i32
    %c0_i32_0 = arith.constant 0 : i32
    %2 = arith.cmpi ne, %1, %c0_i32_0 : i32
    scf.if %2 {
      %c0_78 = arith.constant 0 : index
      %c0_79 = arith.constant 0 : index
      %c0_80 = arith.constant 0 : index
      %256 = vector.load %arg2[%c0_78, %c0_79, %c0_80] : memref<2x8x32xbf16, #tpu.memory_space<vmem>>, vector<2x8x32xbf16>
      %257 = arith.extf %256 : vector<2x8x32xbf16> to vector<2x8x32xf32>
      %c0_81 = arith.constant 0 : index
      %c0_82 = arith.constant 0 : index
      %258 = vector.load %arg3[%c0_81, %c0_82] : memref<8x32xf32, #tpu.memory_space<vmem>>, vector<8x32xf32>
      %259 = vector.shape_cast %258 : vector<8x32xf32> to vector<1x8x32xf32>
      %260 = vector.broadcast %259 : vector<1x8x32xf32> to vector<2x8x32xf32>
      %261 = arith.addf %257, %260 : vector<2x8x32xf32>
      %c0_83 = arith.constant 0 : index
      %c0_84 = arith.constant 0 : index
      %c0_85 = arith.constant 0 : index
      %262 = vector.load %arg20[%c0_83, %c0_84, %c0_85] : memref<2x8x32xf32, #tpu.memory_space<vmem>>, vector<2x8x32xf32>
      tpu.vector_store %arg20[%c0_83, %c0_84, %c0_85], %261 {strides = array<i32>} : memref<2x8x32xf32, #tpu.memory_space<vmem>>, vector<2x8x32xf32>,
    } else {
    }
    %c0 = arith.constant 0 : index
    %c0_1 = arith.constant 0 : index
    %c0_2 = arith.constant 0 : index
    %3 = vector.load %arg20[%c0, %c0_1, %c0_2] : memref<2x8x32xf32, #tpu.memory_space<vmem>>, vector<2x8x32xf32>
    %4 = vector.shape_cast %3 : vector<2x8x32xf32> to vector<16x32xf32>
    %c0_3 = arith.constant 0 : index
    %c0_4 = arith.constant 0 : index
    %c0_5 = arith.constant 0 : index
    %5 = vector.load %arg5[%c0_3, %c0_4, %c0_5] : memref<1x1x32xf32, #tpu.memory_space<vmem>>, vector<1x1x32xf32>
    %6 = vector.shape_cast %5 : vector<1x1x32xf32> to vector<1x32xf32>
    %c0_6 = arith.constant 0 : index
    %c0_7 = arith.constant 0 : index
    %c0_8 = arith.constant 0 : index
    %7 = vector.load %arg6[%c0_6, %c0_7, %c0_8] : memref<1x1x32xf32, #tpu.memory_space<vmem>>, vector<1x1x32xf32>
    %8 = vector.shape_cast %7 : vector<1x1x32xf32> to vector<1x32xf32>
    %cst = arith.constant dense<0.000000e+00> : vector<16xf32>
    %9 = vector.multi_reduction <add>, %4, %cst [1] : vector<16x32xf32> to vector<16xf32>
    %10 = vector.shape_cast %9 : vector<16xf32> to vector<16x1xf32>
    %cst_9 = arith.constant 3.200000e+01 : f32
    %11 = vector.broadcast %cst_9 : f32 to vector<16x1xf32>
    %12 = arith.divf %10, %11 : vector<16x1xf32>
    %13 = vector.broadcast %12 : vector<16x1xf32> to vector<16x32xf32>
    %14 = arith.subf %4, %13 : vector<16x32xf32>
    %15 = arith.mulf %14, %14 : vector<16x32xf32>
    %cst_10 = arith.constant dense<0.000000e+00> : vector<16xf32>
    %16 = vector.multi_reduction <add>, %15, %cst_10 [1] : vector<16x32xf32> to vector<16xf32>
    %17 = vector.shape_cast %16 : vector<16xf32> to vector<16x1xf32>
    %cst_11 = arith.constant 3.200000e+01 : f32
    %18 = vector.broadcast %cst_11 : f32 to vector<16x1xf32>
    %19 = arith.divf %17, %18 : vector<16x1xf32>
    %20 = vector.broadcast %12 : vector<16x1xf32> to vector<16x32xf32>
    %21 = arith.subf %4, %20 : vector<16x32xf32>
    %cst_12 = arith.constant 9.99999974E-6 : f32
    %22 = vector.broadcast %cst_12 : f32 to vector<16x1xf32>
    %23 = arith.addf %19, %22 : vector<16x1xf32>
    %24 = math.rsqrt %23 : vector<16x1xf32>
    %25 = vector.broadcast %24 : vector<16x1xf32> to vector<16x32xf32>
    %26 = arith.mulf %21, %25 : vector<16x32xf32>
    %27 = vector.broadcast %6 : vector<1x32xf32> to vector<16x32xf32>
    %28 = arith.mulf %26, %27 : vector<16x32xf32>
    %29 = vector.broadcast %8 : vector<1x32xf32> to vector<16x32xf32>
    %30 = arith.addf %28, %29 : vector<16x32xf32>
    %31 = arith.truncf %30 : vector<16x32xf32> to vector<16x32xbf16>
    %c0_13 = arith.constant 0 : index
    %c0_14 = arith.constant 0 : index
    %c0_15 = arith.constant 0 : index
    %32 = vector.load %arg7[%c0_13, %c0_14, %c0_15] : memref<1x32x96xbf16, #tpu.memory_space<vmem>>, vector<1x32x96xbf16>
    %33 = vector.shape_cast %32 : vector<1x32x96xbf16> to vector<32x96xbf16>
    %cst_16 = arith.constant dense<0.000000e+00> : vector<16x96xf32>
    %34 = tpu.matmul %31, %33, %cst_16 {dimension_numbers = #tpu.dot_dimension_numbers<[1], [0], [0], [1], [0, 0, 1, 1], [], []>} : vector<16x32xbf16>, vector<32x96xbf16>, vector<16x96xf32> -> vector<16x96xf32>
    %c0_17 = arith.constant 0 : index
    %c0_18 = arith.constant 0 : index
    %c0_19 = arith.constant 0 : index
    %35 = vector.load %arg8[%c0_17, %c0_18, %c0_19] : memref<1x1x96xf32, #tpu.memory_space<vmem>>, vector<1x1x96xf32>
    %36 = vector.shape_cast %35 : vector<1x1x96xf32> to vector<1x96xf32>
    %37 = vector.broadcast %36 : vector<1x96xf32> to vector<16x96xf32>
    %38 = arith.addf %34, %37 : vector<16x96xf32>
    %39 = vector.extract_strided_slice %38 {offsets = [0, 0], sizes = [16, 32], strides = [1, 1]} : vector<16x96xf32> to vector<16x32xf32>
    %cst_20 = arith.constant 0.353553385 : f32
    %40 = vector.broadcast %cst_20 : f32 to vector<16x32xf32>
    %41 = arith.mulf %39, %40 : vector<16x32xf32>
    %42 = vector.extract_strided_slice %38 {offsets = [0, 32], sizes = [16, 32], strides = [1, 1]} : vector<16x96xf32> to vector<16x32xf32>
    %43 = vector.extract_strided_slice %38 {offsets = [0, 64], sizes = [16, 32], strides = [1, 1]} : vector<16x96xf32> to vector<16x32xf32>
    %c0_21 = arith.constant 0 : index
    %c0_22 = arith.constant 0 : index
    %44 = vector.load %arg4[%c0_21, %c0_22] : memref<8x8xf32, #tpu.memory_space<vmem>>, vector<8x8xf32>
    %45 = vector.extract_strided_slice %41 {offsets = [0, 0], sizes = [8, 32], strides = [1, 1]} : vector<16x32xf32> to vector<8x32xf32>
    %46 = vector.extract_strided_slice %45 {offsets = [0, 0], sizes = [8, 8], strides = [1, 1]} : vector<8x32xf32> to vector<8x8xf32>
    %47 = vector.extract_strided_slice %45 {offsets = [0, 8], sizes = [8, 8], strides = [1, 1]} : vector<8x32xf32> to vector<8x8xf32>
    %48 = vector.extract_strided_slice %45 {offsets = [0, 16], sizes = [8, 8], strides = [1, 1]} : vector<8x32xf32> to vector<8x8xf32>
    %49 = vector.extract_strided_slice %45 {offsets = [0, 24], sizes = [8, 8], strides = [1, 1]} : vector<8x32xf32> to vector<8x8xf32>
    %50 = vector.shape_cast %46 : vector<8x8xf32> to vector<1x8x8xf32>
    %51 = vector.shape_cast %47 : vector<8x8xf32> to vector<1x8x8xf32>
    %52 = vector.shape_cast %48 : vector<8x8xf32> to vector<1x8x8xf32>
    %53 = vector.shape_cast %49 : vector<8x8xf32> to vector<1x8x8xf32>
    %54 = tpu.concatenate %50, %51, %52, %53 in 0 : vector<1x8x8xf32>, vector<1x8x8xf32>, vector<1x8x8xf32>, vector<1x8x8xf32> -> vector<4x8x8xf32>
    %55 = arith.truncf %54 : vector<4x8x8xf32> to vector<4x8x8xbf16>
    %56 = vector.extract_strided_slice %42 {offsets = [0, 0], sizes = [8, 32], strides = [1, 1]} : vector<16x32xf32> to vector<8x32xf32>
    %57 = vector.extract_strided_slice %56 {offsets = [0, 0], sizes = [8, 8], strides = [1, 1]} : vector<8x32xf32> to vector<8x8xf32>
    %58 = vector.extract_strided_slice %56 {offsets = [0, 8], sizes = [8, 8], strides = [1, 1]} : vector<8x32xf32> to vector<8x8xf32>
    %59 = vector.extract_strided_slice %56 {offsets = [0, 16], sizes = [8, 8], strides = [1, 1]} : vector<8x32xf32> to vector<8x8xf32>
    %60 = vector.extract_strided_slice %56 {offsets = [0, 24], sizes = [8, 8], strides = [1, 1]} : vector<8x32xf32> to vector<8x8xf32>
    %61 = vector.shape_cast %57 : vector<8x8xf32> to vector<1x8x8xf32>
    %62 = vector.shape_cast %58 : vector<8x8xf32> to vector<1x8x8xf32>
    %63 = vector.shape_cast %59 : vector<8x8xf32> to vector<1x8x8xf32>
    %64 = vector.shape_cast %60 : vector<8x8xf32> to vector<1x8x8xf32>
    %65 = tpu.concatenate %61, %62, %63, %64 in 0 : vector<1x8x8xf32>, vector<1x8x8xf32>, vector<1x8x8xf32>, vector<1x8x8xf32> -> vector<4x8x8xf32>
    %66 = arith.truncf %65 : vector<4x8x8xf32> to vector<4x8x8xbf16>
    %67 = vector.extract_strided_slice %43 {offsets = [0, 0], sizes = [8, 32], strides = [1, 1]} : vector<16x32xf32> to vector<8x32xf32>
    %68 = vector.extract_strided_slice %67 {offsets = [0, 0], sizes = [8, 8], strides = [1, 1]} : vector<8x32xf32> to vector<8x8xf32>
    %69 = vector.extract_strided_slice %67 {offsets = [0, 8], sizes = [8, 8], strides = [1, 1]} : vector<8x32xf32> to vector<8x8xf32>
    %70 = vector.extract_strided_slice %67 {offsets = [0, 16], sizes = [8, 8], strides = [1, 1]} : vector<8x32xf32> to vector<8x8xf32>
    %71 = vector.extract_strided_slice %67 {offsets = [0, 24], sizes = [8, 8], strides = [1, 1]} : vector<8x32xf32> to vector<8x8xf32>
    %72 = vector.shape_cast %68 : vector<8x8xf32> to vector<1x8x8xf32>
    %73 = vector.shape_cast %69 : vector<8x8xf32> to vector<1x8x8xf32>
    %74 = vector.shape_cast %70 : vector<8x8xf32> to vector<1x8x8xf32>
    %75 = vector.shape_cast %71 : vector<8x8xf32> to vector<1x8x8xf32>
    %76 = tpu.concatenate %72, %73, %74, %75 in 0 : vector<1x8x8xf32>, vector<1x8x8xf32>, vector<1x8x8xf32>, vector<1x8x8xf32> -> vector<4x8x8xf32>
    %77 = arith.truncf %76 : vector<4x8x8xf32> to vector<4x8x8xbf16>
    %cst_23 = arith.constant -1.000000e+30 : f32
    %78 = vector.broadcast %cst_23 : f32 to vector<4x8x1xf32>
    %cst_24 = arith.constant 0.000000e+00 : f32
    %79 = vector.broadcast %cst_24 : f32 to vector<4x8x1xf32>
    %cst_25 = arith.constant 0.000000e+00 : f32
    %80 = vector.broadcast %cst_25 : f32 to vector<4x8x8xf32>
    "tpu.trace_start"() <{level = 10 : i32, message = "hqd,hkd->hqk"}> : () -> ()
    %cst_26 = arith.constant dense<0.000000e+00> : vector<4x8x8xf32>
    %81 = tpu.matmul %55, %66, %cst_26 {dimension_numbers = #tpu.dot_dimension_numbers<[2], [2], [1], [1], [0, 0, 0, 1, 1, 1], [0], [0]>} : vector<4x8x8xbf16>, vector<4x8x8xbf16>, vector<4x8x8xf32> -> vector<4x8x8xf32>
    "tpu.trace_stop"() : () -> ()
    %82 = vector.shape_cast %44 : vector<8x8xf32> to vector<1x8x8xf32>
    %83 = vector.broadcast %82 : vector<1x8x8xf32> to vector<4x8x8xf32>
    %84 = arith.addf %81, %83 : vector<4x8x8xf32>
    %cst_27 = arith.constant dense<0xFF800000> : vector<4x8xf32>
    %85 = vector.multi_reduction <maximumf>, %84, %cst_27 [2] : vector<4x8x8xf32> to vector<4x8xf32>
    %86 = vector.shape_cast %85 : vector<4x8xf32> to vector<4x8x1xf32>
    %87 = arith.maximumf %78, %86 : vector<4x8x1xf32>
    %88 = arith.subf %78, %87 : vector<4x8x1xf32>
    %89 = math.exp %88 : vector<4x8x1xf32>
    %90 = vector.broadcast %87 : vector<4x8x1xf32> to vector<4x8x8xf32>
    %91 = arith.subf %84, %90 : vector<4x8x8xf32>
    %92 = math.exp %91 : vector<4x8x8xf32>
    %93 = arith.mulf %89, %79 : vector<4x8x1xf32>
    %cst_28 = arith.constant dense<0.000000e+00> : vector<4x8xf32>
    %94 = vector.multi_reduction <add>, %92, %cst_28 [2] : vector<4x8x8xf32> to vector<4x8xf32>
    %95 = vector.shape_cast %94 : vector<4x8xf32> to vector<4x8x1xf32>
    %96 = arith.addf %93, %95 : vector<4x8x1xf32>
    %97 = vector.broadcast %89 : vector<4x8x1xf32> to vector<4x8x8xf32>
    %98 = arith.mulf %97, %80 : vector<4x8x8xf32>
    %99 = arith.truncf %92 : vector<4x8x8xf32> to vector<4x8x8xbf16>
    "tpu.trace_start"() <{level = 10 : i32, message = "hqk,hkd->hqd"}> : () -> ()
    %cst_29 = arith.constant dense<0.000000e+00> : vector<4x8x8xf32>
    %100 = tpu.matmul %99, %77, %cst_29 {dimension_numbers = #tpu.dot_dimension_numbers<[2], [1], [1], [2], [0, 0, 0, 1, 1, 2], [0], [0]>} : vector<4x8x8xbf16>, vector<4x8x8xbf16>, vector<4x8x8xf32> -> vector<4x8x8xf32>
    "tpu.trace_stop"() : () -> ()
    %101 = arith.addf %98, %100 : vector<4x8x8xf32>
    %102 = tpu.reciprocal %96 {approx = true} : vector<4x8x1xf32> -> vector<4x8x1xf32>
    %103 = vector.broadcast %102 : vector<4x8x1xf32> to vector<4x8x8xf32>
    %104 = arith.mulf %101, %103 : vector<4x8x8xf32>
    %105 = vector.extract_strided_slice %104 {offsets = [0, 0, 0], sizes = [1, 8, 8], strides = [1, 1, 1]} : vector<4x8x8xf32> to vector<1x8x8xf32>
    %106 = vector.shape_cast %105 : vector<1x8x8xf32> to vector<8x8xf32>
    %107 = vector.extract_strided_slice %104 {offsets = [1, 0, 0], sizes = [1, 8, 8], strides = [1, 1, 1]} : vector<4x8x8xf32> to vector<1x8x8xf32>
    %108 = vector.shape_cast %107 : vector<1x8x8xf32> to vector<8x8xf32>
    %109 = vector.extract_strided_slice %104 {offsets = [2, 0, 0], sizes = [1, 8, 8], strides = [1, 1, 1]} : vector<4x8x8xf32> to vector<1x8x8xf32>
    %110 = vector.shape_cast %109 : vector<1x8x8xf32> to vector<8x8xf32>
    %111 = vector.extract_strided_slice %104 {offsets = [3, 0, 0], sizes = [1, 8, 8], strides = [1, 1, 1]} : vector<4x8x8xf32> to vector<1x8x8xf32>
    %112 = vector.shape_cast %111 : vector<1x8x8xf32> to vector<8x8xf32>
    %113 = tpu.concatenate %106, %108, %110, %112 in 1 : vector<8x8xf32>, vector<8x8xf32>, vector<8x8xf32>, vector<8x8xf32> -> vector<8x32xf32>
    %114 = vector.extract_strided_slice %41 {offsets = [8, 0], sizes = [8, 32], strides = [1, 1]} : vector<16x32xf32> to vector<8x32xf32>
    %115 = vector.extract_strided_slice %114 {offsets = [0, 0], sizes = [8, 8], strides = [1, 1]} : vector<8x32xf32> to vector<8x8xf32>
    %116 = vector.extract_strided_slice %114 {offsets = [0, 8], sizes = [8, 8], strides = [1, 1]} : vector<8x32xf32> to vector<8x8xf32>
    %117 = vector.extract_strided_slice %114 {offsets = [0, 16], sizes = [8, 8], strides = [1, 1]} : vector<8x32xf32> to vector<8x8xf32>
    %118 = vector.extract_strided_slice %114 {offsets = [0, 24], sizes = [8, 8], strides = [1, 1]} : vector<8x32xf32> to vector<8x8xf32>
    %119 = vector.shape_cast %115 : vector<8x8xf32> to vector<1x8x8xf32>
    %120 = vector.shape_cast %116 : vector<8x8xf32> to vector<1x8x8xf32>
    %121 = vector.shape_cast %117 : vector<8x8xf32> to vector<1x8x8xf32>
    %122 = vector.shape_cast %118 : vector<8x8xf32> to vector<1x8x8xf32>
    %123 = tpu.concatenate %119, %120, %121, %122 in 0 : vector<1x8x8xf32>, vector<1x8x8xf32>, vector<1x8x8xf32>, vector<1x8x8xf32> -> vector<4x8x8xf32>
    %124 = arith.truncf %123 : vector<4x8x8xf32> to vector<4x8x8xbf16>
    %125 = vector.extract_strided_slice %42 {offsets = [8, 0], sizes = [8, 32], strides = [1, 1]} : vector<16x32xf32> to vector<8x32xf32>
    %126 = vector.extract_strided_slice %125 {offsets = [0, 0], sizes = [8, 8], strides = [1, 1]} : vector<8x32xf32> to vector<8x8xf32>
    %127 = vector.extract_strided_slice %125 {offsets = [0, 8], sizes = [8, 8], strides = [1, 1]} : vector<8x32xf32> to vector<8x8xf32>
    %128 = vector.extract_strided_slice %125 {offsets = [0, 16], sizes = [8, 8], strides = [1, 1]} : vector<8x32xf32> to vector<8x8xf32>
    %129 = vector.extract_strided_slice %125 {offsets = [0, 24], sizes = [8, 8], strides = [1, 1]} : vector<8x32xf32> to vector<8x8xf32>
    %130 = vector.shape_cast %126 : vector<8x8xf32> to vector<1x8x8xf32>
    %131 = vector.shape_cast %127 : vector<8x8xf32> to vector<1x8x8xf32>
    %132 = vector.shape_cast %128 : vector<8x8xf32> to vector<1x8x8xf32>
    %133 = vector.shape_cast %129 : vector<8x8xf32> to vector<1x8x8xf32>
    %134 = tpu.concatenate %130, %131, %132, %133 in 0 : vector<1x8x8xf32>, vector<1x8x8xf32>, vector<1x8x8xf32>, vector<1x8x8xf32> -> vector<4x8x8xf32>
    %135 = arith.truncf %134 : vector<4x8x8xf32> to vector<4x8x8xbf16>
    %136 = vector.extract_strided_slice %43 {offsets = [8, 0], sizes = [8, 32], strides = [1, 1]} : vector<16x32xf32> to vector<8x32xf32>
    %137 = vector.extract_strided_slice %136 {offsets = [0, 0], sizes = [8, 8], strides = [1, 1]} : vector<8x32xf32> to vector<8x8xf32>
    %138 = vector.extract_strided_slice %136 {offsets = [0, 8], sizes = [8, 8], strides = [1, 1]} : vector<8x32xf32> to vector<8x8xf32>
    %139 = vector.extract_strided_slice %136 {offsets = [0, 16], sizes = [8, 8], strides = [1, 1]} : vector<8x32xf32> to vector<8x8xf32>
    %140 = vector.extract_strided_slice %136 {offsets = [0, 24], sizes = [8, 8], strides = [1, 1]} : vector<8x32xf32> to vector<8x8xf32>
    %141 = vector.shape_cast %137 : vector<8x8xf32> to vector<1x8x8xf32>
    %142 = vector.shape_cast %138 : vector<8x8xf32> to vector<1x8x8xf32>
    %143 = vector.shape_cast %139 : vector<8x8xf32> to vector<1x8x8xf32>
    %144 = vector.shape_cast %140 : vector<8x8xf32> to vector<1x8x8xf32>
    %145 = tpu.concatenate %141, %142, %143, %144 in 0 : vector<1x8x8xf32>, vector<1x8x8xf32>, vector<1x8x8xf32>, vector<1x8x8xf32> -> vector<4x8x8xf32>
    %146 = arith.truncf %145 : vector<4x8x8xf32> to vector<4x8x8xbf16>
    %cst_30 = arith.constant -1.000000e+30 : f32
    %147 = vector.broadcast %cst_30 : f32 to vector<4x8x1xf32>
    %cst_31 = arith.constant 0.000000e+00 : f32
    %148 = vector.broadcast %cst_31 : f32 to vector<4x8x1xf32>
    %cst_32 = arith.constant 0.000000e+00 : f32
    %149 = vector.broadcast %cst_32 : f32 to vector<4x8x8xf32>
    "tpu.trace_start"() <{level = 10 : i32, message = "hqd,hkd->hqk"}> : () -> ()
    %cst_33 = arith.constant dense<0.000000e+00> : vector<4x8x8xf32>
    %150 = tpu.matmul %124, %135, %cst_33 {dimension_numbers = #tpu.dot_dimension_numbers<[2], [2], [1], [1], [0, 0, 0, 1, 1, 1], [0], [0]>} : vector<4x8x8xbf16>, vector<4x8x8xbf16>, vector<4x8x8xf32> -> vector<4x8x8xf32>
    "tpu.trace_stop"() : () -> ()
    %151 = vector.shape_cast %44 : vector<8x8xf32> to vector<1x8x8xf32>
    %152 = vector.broadcast %151 : vector<1x8x8xf32> to vector<4x8x8xf32>
    %153 = arith.addf %150, %152 : vector<4x8x8xf32>
    %cst_34 = arith.constant dense<0xFF800000> : vector<4x8xf32>
    %154 = vector.multi_reduction <maximumf>, %153, %cst_34 [2] : vector<4x8x8xf32> to vector<4x8xf32>
    %155 = vector.shape_cast %154 : vector<4x8xf32> to vector<4x8x1xf32>
    %156 = arith.maximumf %147, %155 : vector<4x8x1xf32>
    %157 = arith.subf %147, %156 : vector<4x8x1xf32>
    %158 = math.exp %157 : vector<4x8x1xf32>
    %159 = vector.broadcast %156 : vector<4x8x1xf32> to vector<4x8x8xf32>
    %160 = arith.subf %153, %159 : vector<4x8x8xf32>
    %161 = math.exp %160 : vector<4x8x8xf32>
    %162 = arith.mulf %158, %148 : vector<4x8x1xf32>
    %cst_35 = arith.constant dense<0.000000e+00> : vector<4x8xf32>
    %163 = vector.multi_reduction <add>, %161, %cst_35 [2] : vector<4x8x8xf32> to vector<4x8xf32>
    %164 = vector.shape_cast %163 : vector<4x8xf32> to vector<4x8x1xf32>
    %165 = arith.addf %162, %164 : vector<4x8x1xf32>
    %166 = vector.broadcast %158 : vector<4x8x1xf32> to vector<4x8x8xf32>
    %167 = arith.mulf %166, %149 : vector<4x8x8xf32>
    %168 = arith.truncf %161 : vector<4x8x8xf32> to vector<4x8x8xbf16>
    "tpu.trace_start"() <{level = 10 : i32, message = "hqk,hkd->hqd"}> : () -> ()
    %cst_36 = arith.constant dense<0.000000e+00> : vector<4x8x8xf32>
    %169 = tpu.matmul %168, %146, %cst_36 {dimension_numbers = #tpu.dot_dimension_numbers<[2], [1], [1], [2], [0, 0, 0, 1, 1, 2], [0], [0]>} : vector<4x8x8xbf16>, vector<4x8x8xbf16>, vector<4x8x8xf32> -> vector<4x8x8xf32>
    "tpu.trace_stop"() : () -> ()
    %170 = arith.addf %167, %169 : vector<4x8x8xf32>
    %171 = tpu.reciprocal %165 {approx = true} : vector<4x8x1xf32> -> vector<4x8x1xf32>
    %172 = vector.broadcast %171 : vector<4x8x1xf32> to vector<4x8x8xf32>
    %173 = arith.mulf %170, %172 : vector<4x8x8xf32>
    %174 = vector.extract_strided_slice %173 {offsets = [0, 0, 0], sizes = [1, 8, 8], strides = [1, 1, 1]} : vector<4x8x8xf32> to vector<1x8x8xf32>
    %175 = vector.shape_cast %174 : vector<1x8x8xf32> to vector<8x8xf32>
    %176 = vector.extract_strided_slice %173 {offsets = [1, 0, 0], sizes = [1, 8, 8], strides = [1, 1, 1]} : vector<4x8x8xf32> to vector<1x8x8xf32>
    %177 = vector.shape_cast %176 : vector<1x8x8xf32> to vector<8x8xf32>
    %178 = vector.extract_strided_slice %173 {offsets = [2, 0, 0], sizes = [1, 8, 8], strides = [1, 1, 1]} : vector<4x8x8xf32> to vector<1x8x8xf32>
    %179 = vector.shape_cast %178 : vector<1x8x8xf32> to vector<8x8xf32>
    %180 = vector.extract_strided_slice %173 {offsets = [3, 0, 0], sizes = [1, 8, 8], strides = [1, 1, 1]} : vector<4x8x8xf32> to vector<1x8x8xf32>
    %181 = vector.shape_cast %180 : vector<1x8x8xf32> to vector<8x8xf32>
    %182 = tpu.concatenate %175, %177, %179, %181 in 1 : vector<8x8xf32>, vector<8x8xf32>, vector<8x8xf32>, vector<8x8xf32> -> vector<8x32xf32>
    %183 = tpu.concatenate %113, %182 in 0 : vector<8x32xf32>, vector<8x32xf32> -> vector<16x32xf32>
    %184 = arith.truncf %183 : vector<16x32xf32> to vector<16x32xbf16>
    %c0_37 = arith.constant 0 : index
    %c0_38 = arith.constant 0 : index
    %c0_39 = arith.constant 0 : index
    %185 = vector.load %arg9[%c0_37, %c0_38, %c0_39] : memref<1x32x32xbf16, #tpu.memory_space<vmem>>, vector<1x32x32xbf16>
    %186 = vector.shape_cast %185 : vector<1x32x32xbf16> to vector<32x32xbf16>
    %cst_40 = arith.constant dense<0.000000e+00> : vector<16x32xf32>
    %187 = tpu.matmul %184, %186, %cst_40 {dimension_numbers = #tpu.dot_dimension_numbers<[1], [0], [0], [1], [0, 0, 1, 1], [], []>} : vector<16x32xbf16>, vector<32x32xbf16>, vector<16x32xf32> -> vector<16x32xf32>
    %c0_41 = arith.constant 0 : index
    %c0_42 = arith.constant 0 : index
    %c0_43 = arith.constant 0 : index
    %188 = vector.load %arg10[%c0_41, %c0_42, %c0_43] : memref<1x1x32xf32, #tpu.memory_space<vmem>>, vector<1x1x32xf32>
    %189 = vector.shape_cast %188 : vector<1x1x32xf32> to vector<1x32xf32>
    %190 = vector.broadcast %189 : vector<1x32xf32> to vector<16x32xf32>
    %191 = arith.addf %187, %190 : vector<16x32xf32>
    %192 = arith.addf %4, %191 : vector<16x32xf32>
    %c0_44 = arith.constant 0 : index
    %c0_45 = arith.constant 0 : index
    %c0_46 = arith.constant 0 : index
    %193 = vector.load %arg11[%c0_44, %c0_45, %c0_46] : memref<1x1x32xf32, #tpu.memory_space<vmem>>, vector<1x1x32xf32>
    %194 = vector.shape_cast %193 : vector<1x1x32xf32> to vector<1x32xf32>
    %c0_47 = arith.constant 0 : index
    %c0_48 = arith.constant 0 : index
    %c0_49 = arith.constant 0 : index
    %195 = vector.load %arg12[%c0_47, %c0_48, %c0_49] : memref<1x1x32xf32, #tpu.memory_space<vmem>>, vector<1x1x32xf32>
    %196 = vector.shape_cast %195 : vector<1x1x32xf32> to vector<1x32xf32>
    %cst_50 = arith.constant dense<0.000000e+00> : vector<16xf32>
    %197 = vector.multi_reduction <add>, %192, %cst_50 [1] : vector<16x32xf32> to vector<16xf32>
    %198 = vector.shape_cast %197 : vector<16xf32> to vector<16x1xf32>
    %cst_51 = arith.constant 3.200000e+01 : f32
    %199 = vector.broadcast %cst_51 : f32 to vector<16x1xf32>
    %200 = arith.divf %198, %199 : vector<16x1xf32>
    %201 = vector.broadcast %200 : vector<16x1xf32> to vector<16x32xf32>
    %202 = arith.subf %192, %201 : vector<16x32xf32>
    %203 = arith.mulf %202, %202 : vector<16x32xf32>
    %cst_52 = arith.constant dense<0.000000e+00> : vector<16xf32>
    %204 = vector.multi_reduction <add>, %203, %cst_52 [1] : vector<16x32xf32> to vector<16xf32>
    %205 = vector.shape_cast %204 : vector<16xf32> to vector<16x1xf32>
    %cst_53 = arith.constant 3.200000e+01 : f32
    %206 = vector.broadcast %cst_53 : f32 to vector<16x1xf32>
    %207 = arith.divf %205, %206 : vector<16x1xf32>
    %208 = vector.broadcast %200 : vector<16x1xf32> to vector<16x32xf32>
    %209 = arith.subf %192, %208 : vector<16x32xf32>
    %cst_54 = arith.constant 9.99999974E-6 : f32
    %210 = vector.broadcast %cst_54 : f32 to vector<16x1xf32>
    %211 = arith.addf %207, %210 : vector<16x1xf32>
    %212 = math.rsqrt %211 : vector<16x1xf32>
    %213 = vector.broadcast %212 : vector<16x1xf32> to vector<16x32xf32>
    %214 = arith.mulf %209, %213 : vector<16x32xf32>
    %215 = vector.broadcast %194 : vector<1x32xf32> to vector<16x32xf32>
    %216 = arith.mulf %214, %215 : vector<16x32xf32>
    %217 = vector.broadcast %196 : vector<1x32xf32> to vector<16x32xf32>
    %218 = arith.addf %216, %217 : vector<16x32xf32>
    %219 = arith.truncf %218 : vector<16x32xf32> to vector<16x32xbf16>
    %c0_55 = arith.constant 0 : index
    %c0_56 = arith.constant 0 : index
    %c0_57 = arith.constant 0 : index
    %220 = vector.load %arg13[%c0_55, %c0_56, %c0_57] : memref<1x32x128xbf16, #tpu.memory_space<vmem>>, vector<1x32x128xbf16>
    %221 = vector.shape_cast %220 : vector<1x32x128xbf16> to vector<32x128xbf16>
    %c0_58 = arith.constant 0 : index
    %c0_59 = arith.constant 0 : index
    %c0_60 = arith.constant 0 : index
    %222 = vector.load %arg15[%c0_58, %c0_59, %c0_60] : memref<1x128x32xbf16, #tpu.memory_space<vmem>>, vector<1x128x32xbf16>
    %223 = vector.shape_cast %222 : vector<1x128x32xbf16> to vector<128x32xbf16>
    %c0_61 = arith.constant 0 : index
    %c0_62 = arith.constant 0 : index
    %c0_63 = arith.constant 0 : index
    %224 = vector.load %arg14[%c0_61, %c0_62, %c0_63] : memref<1x1x128xf32, #tpu.memory_space<vmem>>, vector<1x1x128xf32>
    %225 = vector.shape_cast %224 : vector<1x1x128xf32> to vector<1x128xf32>
    %cst_64 = arith.constant 0.000000e+00 : f32
    %226 = vector.broadcast %cst_64 : f32 to vector<16x32xf32>
    %cst_65 = arith.constant dense<0.000000e+00> : vector<16x128xf32>
    %227 = tpu.matmul %219, %221, %cst_65 {dimension_numbers = #tpu.dot_dimension_numbers<[1], [0], [0], [1], [0, 0, 1, 1], [], []>} : vector<16x32xbf16>, vector<32x128xbf16>, vector<16x128xf32> -> vector<16x128xf32>
    %228 = vector.broadcast %225 : vector<1x128xf32> to vector<16x128xf32>
    %229 = arith.addf %227, %228 : vector<16x128xf32>
    %cst_66 = arith.constant 5.000000e-01 : f32
    %230 = vector.broadcast %cst_66 : f32 to vector<16x128xf32>
    %231 = arith.mulf %230, %229 : vector<16x128xf32>
    %cst_67 = arith.constant 4.471500e-02 : f32
    %232 = vector.broadcast %cst_67 : f32 to vector<16x128xf32>
    %233 = arith.mulf %232, %229 : vector<16x128xf32>
    %234 = arith.mulf %233, %229 : vector<16x128xf32>
    %235 = arith.mulf %234, %229 : vector<16x128xf32>
    %236 = arith.addf %229, %235 : vector<16x128xf32>
    %cst_68 = arith.constant 0.797884583 : f32
    %237 = vector.broadcast %cst_68 : f32 to vector<16x128xf32>
    %238 = arith.mulf %237, %236 : vector<16x128xf32>
    %239 = math.tanh %238 : vector<16x128xf32>
    %cst_69 = arith.constant 1.000000e+00 : f32
    %240 = vector.broadcast %cst_69 : f32 to vector<16x128xf32>
    %241 = arith.addf %240, %239 : vector<16x128xf32>
    %242 = arith.mulf %231, %241 : vector<16x128xf32>
    %243 = arith.truncf %242 : vector<16x128xf32> to vector<16x128xbf16>
    %cst_70 = arith.constant dense<0.000000e+00> : vector<16x32xf32>
    %244 = tpu.matmul %243, %223, %cst_70 {dimension_numbers = #tpu.dot_dimension_numbers<[1], [0], [0], [1], [0, 0, 1, 1], [], []>} : vector<16x128xbf16>, vector<128x32xbf16>, vector<16x32xf32> -> vector<16x32xf32>
    %245 = arith.addf %226, %244 : vector<16x32xf32>
    %246 = arith.addf %192, %245 : vector<16x32xf32>
    %c0_71 = arith.constant 0 : index
    %c0_72 = arith.constant 0 : index
    %c0_73 = arith.constant 0 : index
    %247 = vector.load %arg16[%c0_71, %c0_72, %c0_73] : memref<1x1x32xf32, #tpu.memory_space<vmem>>, vector<1x1x32xf32>
    %248 = vector.shape_cast %247 : vector<1x1x32xf32> to vector<1x32xf32>
    %249 = vector.broadcast %248 : vector<1x32xf32> to vector<16x32xf32>
    %250 = arith.addf %246, %249 : vector<16x32xf32>
    %251 = vector.shape_cast %250 : vector<16x32xf32> to vector<2x8x32xf32>
    %c0_74 = arith.constant 0 : index
    %c0_75 = arith.constant 0 : index
    %c0_76 = arith.constant 0 : index
    %252 = vector.load %arg20[%c0_74, %c0_75, %c0_76] : memref<2x8x32xf32, #tpu.memory_space<vmem>>, vector<2x8x32xf32>
    tpu.vector_store %arg20[%c0_74, %c0_75, %c0_76], %251 {strides = array<i32>} : memref<2x8x32xf32, #tpu.memory_space<vmem>>, vector<2x8x32xf32>,
    %c1_i32 = arith.constant 1 : i32
    %253 = arith.cmpi eq, %arg1, %c1_i32 : i32
    %254 = arith.extui %253 : i1 to i32
    %c0_i32_77 = arith.constant 0 : i32
    %255 = arith.cmpi ne, %254, %c0_i32_77 : i32
    scf.if %255 {
      %c0_78 = arith.constant 0 : index
      %c0_79 = arith.constant 0 : index
      %256 = vector.load %arg17[%c0_78, %c0_79] : memref<1x32xf32, #tpu.memory_space<vmem>>, vector<1x32xf32>
      %c0_80 = arith.constant 0 : index
      %c0_81 = arith.constant 0 : index
      %257 = vector.load %arg18[%c0_80, %c0_81] : memref<1x32xf32, #tpu.memory_space<vmem>>, vector<1x32xf32>
      %cst_82 = arith.constant dense<0.000000e+00> : vector<16xf32>
      %258 = vector.multi_reduction <add>, %250, %cst_82 [1] : vector<16x32xf32> to vector<16xf32>
      %259 = vector.shape_cast %258 : vector<16xf32> to vector<16x1xf32>
      %cst_83 = arith.constant 3.200000e+01 : f32
      %260 = vector.broadcast %cst_83 : f32 to vector<16x1xf32>
      %261 = arith.divf %259, %260 : vector<16x1xf32>
      %262 = vector.broadcast %261 : vector<16x1xf32> to vector<16x32xf32>
      %263 = arith.subf %250, %262 : vector<16x32xf32>
      %264 = arith.mulf %263, %263 : vector<16x32xf32>
      %cst_84 = arith.constant dense<0.000000e+00> : vector<16xf32>
      %265 = vector.multi_reduction <add>, %264, %cst_84 [1] : vector<16x32xf32> to vector<16xf32>
      %266 = vector.shape_cast %265 : vector<16xf32> to vector<16x1xf32>
      %cst_85 = arith.constant 3.200000e+01 : f32
      %267 = vector.broadcast %cst_85 : f32 to vector<16x1xf32>
      %268 = arith.divf %266, %267 : vector<16x1xf32>
      %269 = vector.broadcast %261 : vector<16x1xf32> to vector<16x32xf32>
      %270 = arith.subf %250, %269 : vector<16x32xf32>
      %cst_86 = arith.constant 9.99999974E-6 : f32
      %271 = vector.broadcast %cst_86 : f32 to vector<16x1xf32>
      %272 = arith.addf %268, %271 : vector<16x1xf32>
      %273 = math.rsqrt %272 : vector<16x1xf32>
      %274 = vector.broadcast %273 : vector<16x1xf32> to vector<16x32xf32>
      %275 = arith.mulf %270, %274 : vector<16x32xf32>
      %276 = vector.broadcast %256 : vector<1x32xf32> to vector<16x32xf32>
      %277 = arith.mulf %275, %276 : vector<16x32xf32>
      %278 = vector.broadcast %257 : vector<1x32xf32> to vector<16x32xf32>
      %279 = arith.addf %277, %278 : vector<16x32xf32>
      %280 = vector.shape_cast %279 : vector<16x32xf32> to vector<2x8x32xf32>
      %c0_87 = arith.constant 0 : index
      %c0_88 = arith.constant 0 : index
      %c0_89 = arith.constant 0 : index
      %281 = vector.load %arg19[%c0_87, %c0_88, %c0_89] : memref<2x8x32xf32, #tpu.memory_space<vmem>>, vector<2x8x32xf32>
      tpu.vector_store %arg19[%c0_87, %c0_88, %c0_89], %280 {strides = array<i32>} : memref<2x8x32xf32, #tpu.memory_space<vmem>>, vector<2x8x32xf32>,
    } else {
    }
    return
  }
  func.func @transform_0(%arg0: i32, %arg1: i32) -> (i32, i32, i32) {
    %c0_i32 = arith.constant 0 : i32
    %c0_i32_0 = arith.constant 0 : i32
    %c0_i32_1 = arith.constant 0 : i32
    return %arg0, %c0_i32, %c0_i32_0 : i32, i32, i32
  }
  func.func @transform_1(%arg0: i32, %arg1: i32) -> (i32, i32) {
    %c0_i32 = arith.constant 0 : i32
    %c0_i32_0 = arith.constant 0 : i32
    %c0_i32_1 = arith.constant 0 : i32
    return %c0_i32, %c0_i32_0 : i32, i32
  }
  func.func @transform_2(%arg0: i32, %arg1: i32) -> (i32, i32) {
    %c0_i32 = arith.constant 0 : i32
    %c0_i32_0 = arith.constant 0 : i32
    %c0_i32_1 = arith.constant 0 : i32
    return %c0_i32, %c0_i32_0 : i32, i32
  }
  func.func @transform_3(%arg0: i32, %arg1: i32) -> (i32, i32, i32) {
    %c0_i32 = arith.constant 0 : i32
    %c0_i32_0 = arith.constant 0 : i32
    %c0_i32_1 = arith.constant 0 : i32
    return %arg1, %c0_i32, %c0_i32_0 : i32, i32, i32
  }
  func.func @transform_4(%arg0: i32, %arg1: i32) -> (i32, i32, i32) {
    %c0_i32 = arith.constant 0 : i32
    %c0_i32_0 = arith.constant 0 : i32
    %c0_i32_1 = arith.constant 0 : i32
    return %arg1, %c0_i32, %c0_i32_0 : i32, i32, i32
  }
  func.func @transform_5(%arg0: i32, %arg1: i32) -> (i32, i32, i32) {
    %c0_i32 = arith.constant 0 : i32
    %c0_i32_0 = arith.constant 0 : i32
    %c0_i32_1 = arith.constant 0 : i32
    return %arg1, %c0_i32, %c0_i32_0 : i32, i32, i32
  }
  func.func @transform_6(%arg0: i32, %arg1: i32) -> (i32, i32, i32) {
    %c0_i32 = arith.constant 0 : i32
    %c0_i32_0 = arith.constant 0 : i32
    %c0_i32_1 = arith.constant 0 : i32
    return %arg1, %c0_i32, %c0_i32_0 : i32, i32, i32
  }
  func.func @transform_7(%arg0: i32, %arg1: i32) -> (i32, i32, i32) {
    %c0_i32 = arith.constant 0 : i32
    %c0_i32_0 = arith.constant 0 : i32
    %c0_i32_1 = arith.constant 0 : i32
    return %arg1, %c0_i32, %c0_i32_0 : i32, i32, i32
  }
  func.func @transform_8(%arg0: i32, %arg1: i32) -> (i32, i32, i32) {
    %c0_i32 = arith.constant 0 : i32
    %c0_i32_0 = arith.constant 0 : i32
    %c0_i32_1 = arith.constant 0 : i32
    return %arg1, %c0_i32, %c0_i32_0 : i32, i32, i32
  }
  func.func @transform_9(%arg0: i32, %arg1: i32) -> (i32, i32, i32) {
    %c0_i32 = arith.constant 0 : i32
    %c0_i32_0 = arith.constant 0 : i32
    %c0_i32_1 = arith.constant 0 : i32
    return %arg1, %c0_i32, %c0_i32_0 : i32, i32, i32
  }
  func.func @transform_10(%arg0: i32, %arg1: i32) -> (i32, i32, i32) {
    %c0_i32 = arith.constant 0 : i32
    %c0_i32_0 = arith.constant 0 : i32
    %c0_i32_1 = arith.constant 0 : i32
    return %arg1, %c0_i32, %c0_i32_0 : i32, i32, i32
  }
  func.func @transform_11(%arg0: i32, %arg1: i32) -> (i32, i32, i32) {
    %c0_i32 = arith.constant 0 : i32
    %c0_i32_0 = arith.constant 0 : i32
    %c0_i32_1 = arith.constant 0 : i32
    return %arg1, %c0_i32, %c0_i32_0 : i32, i32, i32
  }
  func.func @transform_12(%arg0: i32, %arg1: i32) -> (i32, i32, i32) {
    %c0_i32 = arith.constant 0 : i32
    %c0_i32_0 = arith.constant 0 : i32
    %c0_i32_1 = arith.constant 0 : i32
    return %arg1, %c0_i32, %c0_i32_0 : i32, i32, i32
  }
  func.func @transform_13(%arg0: i32, %arg1: i32) -> (i32, i32, i32) {
    %c0_i32 = arith.constant 0 : i32
    %c0_i32_0 = arith.constant 0 : i32
    %c0_i32_1 = arith.constant 0 : i32
    return %arg1, %c0_i32, %c0_i32_0 : i32, i32, i32
  }
  func.func @transform_14(%arg0: i32, %arg1: i32) -> (i32, i32, i32) {
    %c0_i32 = arith.constant 0 : i32
    %c0_i32_0 = arith.constant 0 : i32
    %c0_i32_1 = arith.constant 0 : i32
    return %arg1, %c0_i32, %c0_i32_0 : i32, i32, i32
  }
  func.func @transform_15(%arg0: i32, %arg1: i32) -> (i32, i32) {
    %c0_i32 = arith.constant 0 : i32
    %c0_i32_0 = arith.constant 0 : i32
    %c0_i32_1 = arith.constant 0 : i32
    return %c0_i32, %c0_i32_0 : i32, i32
  }
  func.func @transform_16(%arg0: i32, %arg1: i32) -> (i32, i32) {
    %c0_i32 = arith.constant 0 : i32
    %c0_i32_0 = arith.constant 0 : i32
    %c0_i32_1 = arith.constant 0 : i32
    return %c0_i32, %c0_i32_0 : i32, i32
  }
  func.func @transform_17(%arg0: i32, %arg1: i32) -> (i32, i32, i32) {
    %c0_i32 = arith.constant 0 : i32
    %c0_i32_0 = arith.constant 0 : i32
    %c0_i32_1 = arith.constant 0 : i32
    return %arg0, %c0_i32, %c0_i32_0 : i32, i32, i32
  }
}

</mosaic_0001>

<llo_original>
// kernel: tpu_custom_call.1
$region0: #{tpu_custom_call.1}
  #allocation0 [shape = 'u32[]', space=smem, size = 0x4, offset = 0x4, fixed_abs, tag = 'smem constant byte address 0x4 - core index']
  #allocation1 [shape = 'u32[72,128]{1,0:T(1,128)}', space=vmem, size = 0x9000, scoped, tag = 'internal scratch']
  #allocation2 [shape = 'f32[2,8,32]{2,1,0:T(8,128)}', space=vmem, size = 0x2000, scoped, tag = 'scratch operand']
  %s0 = inlined_call_operand.vmem [shape: bf16[2,8,32], index: 0, kind: input, shape index: {}]
  %s1 = inlined_call_operand.vmem [shape: f32[8,32], index: 1, kind: input, shape index: {}]
  %s2 = inlined_call_operand.vmem [shape: f32[8,8], index: 2, kind: input, shape index: {}]
  %s3 = inlined_call_operand.vmem [shape: f32[2,1,32], index: 3, kind: input, shape index: {}]
  %s4 = inlined_call_operand.vmem [shape: f32[2,1,32], index: 4, kind: input, shape index: {}]
  %s5 = inlined_call_operand.vmem [shape: bf16[2,32,96], index: 5, kind: input, shape index: {}]
  %s6 = inlined_call_operand.vmem [shape: f32[2,1,96], index: 6, kind: input, shape index: {}]
  %s7 = inlined_call_operand.vmem [shape: bf16[2,32,32], index: 7, kind: input, shape index: {}]
  %s8 = inlined_call_operand.vmem [shape: f32[2,1,32], index: 8, kind: input, shape index: {}]
  %s9 = inlined_call_operand.vmem [shape: f32[2,1,32], index: 9, kind: input, shape index: {}]
  %s10 = inlined_call_operand.vmem [shape: f32[2,1,32], index: 10, kind: input, shape index: {}]
  %s11 = inlined_call_operand.vmem [shape: bf16[2,32,128], index: 11, kind: input, shape index: {}]
  %s12 = inlined_call_operand.vmem [shape: f32[2,1,128], index: 12, kind: input, shape index: {}]
  %s13 = inlined_call_operand.vmem [shape: bf16[2,128,32], index: 13, kind: input, shape index: {}]
  %s14 = inlined_call_operand.vmem [shape: f32[2,1,32], index: 14, kind: input, shape index: {}]
  %s15 = inlined_call_operand.vmem [shape: f32[1,32], index: 15, kind: input, shape index: {}]
  %s16 = inlined_call_operand.vmem [shape: f32[1,32], index: 16, kind: input, shape index: {}]
  %s17 = inlined_call_operand.hbm [shape: f32[2,8,32], index: 17, kind: output, shape index: {}]
  %s18 = sld [smem:[#allocation0]]
  $region109: #{tpu_custom_call.1} parent=0
    _
  %s20 = ssub.s32 1, %s18
  %s21 = scalar_select 0, %s20, %s18
  $region1: #{tpu_custom_call.1} parent=0
    #allocation3 [shape = 'u8[8192]{0}', space=vmem, size = 0x2000, scoped, tag = 'output window, operand 0, single buffered']
    #allocation4 [shape = 's32[2]{0}', space=sflag, size = 0x8, scoped, tag = 'scoped memory for tpu_custom_call.1']
    %22 = vsyncpa [#allocation4], 0
    loop: start=0, step=1, limit=4
    $region2: #{tpu_custom_call.1} parent=1 // loop_pre_header
      _
    $region3: #{tpu_custom_call.1} parent=1 // loop_header
      %s24 = sphi 0, %s28
      %p25 = scmp.ge.s32.totalorder %s24, 4
      %s31 = sphi 0, %s43
      %s32 = sphi 0, %s39
      %s33 = sphi 0, %s31
      %s34 = sphi 0, %s32
      %s35 = sphi 0, %s33
      %s36 = sphi 0, %s34
      %s46 = sphi 0, %s48
      %s49 = sphi 0, %s46
      %s50 = sphi 0, %s49
      %s66 = sphi 0, %s50
      %s70 = sphi 0, %s70
      %s72 = sphi 0, %s70
      %s73 = sphi 0, %s72
      %s87 = sphi 0, %s73
      %s91 = sphi 0, %s91
      %s93 = sphi 0, %s91
      %s94 = sphi 0, %s93
      %s108 = sphi 0, %s94
      %s114 = sphi 0, %s116
      %s117 = sphi 0, %s114
      %s118 = sphi 0, %s117
      %s134 = sphi 0, %s118
      %s140 = sphi 0, %s142
      %s143 = sphi 0, %s140
      %s144 = sphi 0, %s143
      %s160 = sphi 0, %s144
      %s166 = sphi 0, %s168
      %s169 = sphi 0, %s166
      %s170 = sphi 0, %s169
      %s186 = sphi 0, %s170
      %s192 = sphi 0, %s194
      %s195 = sphi 0, %s192
      %s196 = sphi 0, %s195
      %s212 = sphi 0, %s196
      %s218 = sphi 0, %s220
      %s221 = sphi 0, %s218
      %s222 = sphi 0, %s221
      %s238 = sphi 0, %s222
      %s244 = sphi 0, %s246
      %s247 = sphi 0, %s244
      %s248 = sphi 0, %s247
      %s264 = sphi 0, %s248
      %s270 = sphi 0, %s272
      %s273 = sphi 0, %s270
      %s274 = sphi 0, %s273
      %s290 = sphi 0, %s274
      %s296 = sphi 0, %s298
      %s299 = sphi 0, %s296
      %s300 = sphi 0, %s299
      %s316 = sphi 0, %s300
      %s322 = sphi 0, %s324
      %s325 = sphi 0, %s322
      %s326 = sphi 0, %s325
      %s342 = sphi 0, %s326
      %s348 = sphi 0, %s350
      %s351 = sphi 0, %s348
      %s352 = sphi 0, %s351
      %s368 = sphi 0, %s352
      %s374 = sphi 0, %s376
      %s377 = sphi 0, %s374
      %s378 = sphi 0, %s377
      %s394 = sphi 0, %s378
      %s400 = sphi 0, %s402
      %s403 = sphi 0, %s400
      %s404 = sphi 0, %s403
      %s420 = sphi 0, %s404
      %s424 = sphi 0, %s424
      %s426 = sphi 0, %s424
      %s427 = sphi 0, %s426
      %s441 = sphi 0, %s427
      %s445 = sphi 0, %s445
      %s447 = sphi 0, %s445
      %s448 = sphi 0, %s447
      %s462 = sphi 0, %s448
      %s468 = sphi 0, %s470
      %s471 = sphi 0, %s468
      %s472 = sphi 0, %s471
      %s488 = sphi 0, %s472
    $region4: #{tpu_custom_call.1} parent=1 // loop_header_branch
      %27 = sbr.rel (%p25) target = $region8
    $region5: #{tpu_custom_call.1} parent=1 // loop_body
      %s29 = ssub.s32 %s24, 1
      %s30 = ssub.s32 %s24, 2
      %s37 = sadd.s32 1, %s32
      %p38 = scmp.ge.s32.totalorder %s37, 2
      %s39 = scalar_select %p38, 0, %s37
      %s40 = sadd.s32 1, %s31
      %s41 = scalar_select %p38, %s40, %s31
      %p42 = scmp.ge.s32.totalorder %s41, 1
      %s43 = scalar_select %p42, 0, %s41
      %s44 = ssub.s32 %s31, %s43
      %p45 = scmp.eq.s32.totalorder %s44, 0
      %s47 = sadd.s32 %s46, 1
      %s48 = scalar_select %p45, %s46, %s47
      %p51 = pneg %p45
      %p52 = scmp.eq.s32.totalorder %s24, 1
      %p53 = por %p51, %p52
      %p54 = scmp.ne.s32.totalorder %s46, %s49
      %p55 = scmp.eq.s32.totalorder %s24, 0
      %p56 = por %p54, %p55
      %p57 = scmp.ne.s32.totalorder %s46, %s49
      %p58 = scmp.eq.s32.totalorder %s29, 1
      %p59 = por %p57, %p58
      %p60 = scmp.ne.s32.totalorder %s49, %s50
      %p61 = scmp.eq.s32.totalorder %s29, 0
      %p62 = por %p60, %p61
      %p63 = scmp.ne.s32.totalorder %s49, %s50
      %p64 = scmp.eq.s32.totalorder %s30, 1
      %p65 = por %p63, %p64
      %p67 = scmp.ne.s32.totalorder %s50, %s66
      %p68 = scmp.eq.s32.totalorder %s30, 0
      %p69 = por %p67, %p68
      %s71 = sadd.s32 %s70, 1
      %p74 = scmp.eq.s32.totalorder %s24, 1
      %p75 = scmp.ne.s32.totalorder %s70, %s72
      %p76 = scmp.eq.s32.totalorder %s24, 0
      %p77 = por %p75, %p76
      %p78 = scmp.ne.s32.totalorder %s70, %s72
      %p79 = scmp.eq.s32.totalorder %s29, 1
      %p80 = por %p78, %p79
      %p81 = scmp.ne.s32.totalorder %s72, %s73
      %p82 = scmp.eq.s32.totalorder %s29, 0
      %p83 = por %p81, %p82
      %p84 = scmp.ne.s32.totalorder %s72, %s73
      %p85 = scmp.eq.s32.totalorder %s30, 1
      %p86 = por %p84, %p85
      %p88 = scmp.ne.s32.totalorder %s73, %s87
      %p89 = scmp.eq.s32.totalorder %s30, 0
      %p90 = por %p88, %p89
      %s92 = sadd.s32 %s91, 1
      %p95 = scmp.eq.s32.totalorder %s24, 1
      %p96 = scmp.ne.s32.totalorder %s91, %s93
      %p97 = scmp.eq.s32.totalorder %s24, 0
      %p98 = por %p96, %p97
      %p99 = scmp.ne.s32.totalorder %s91, %s93
      %p100 = scmp.eq.s32.totalorder %s29, 1
      %p101 = por %p99, %p100
      %p102 = scmp.ne.s32.totalorder %s93, %s94
      %p103 = scmp.eq.s32.totalorder %s29, 0
      %p104 = por %p102, %p103
      %p105 = scmp.ne.s32.totalorder %s93, %s94
      %p106 = scmp.eq.s32.totalorder %s30, 1
      %p107 = por %p105, %p106
      %p109 = scmp.ne.s32.totalorder %s94, %s108
      %p110 = scmp.eq.s32.totalorder %s30, 0
      %p111 = por %p109, %p110
      %s112 = ssub.s32 %s32, %s39
      %p113 = scmp.eq.s32.totalorder %s112, 0
      %s115 = sadd.s32 %s114, 1
      %s116 = scalar_select %p113, %s114, %s115
      %p119 = pneg %p113
      %p120 = scmp.eq.s32.totalorder %s24, 1
      %p121 = por %p119, %p120
      %p122 = scmp.ne.s32.totalorder %s114, %s117
      %p123 = scmp.eq.s32.totalorder %s24, 0
      %p124 = por %p122, %p123
      %p125 = scmp.ne.s32.totalorder %s114, %s117
      %p126 = scmp.eq.s32.totalorder %s29, 1
      %p127 = por %p125, %p126
      %p128 = scmp.ne.s32.totalorder %s117, %s118
      %p129 = scmp.eq.s32.totalorder %s29, 0
      %p130 = por %p128, %p129
      %p131 = scmp.ne.s32.totalorder %s117, %s118
      %p132 = scmp.eq.s32.totalorder %s30, 1
      %p133 = por %p131, %p132
      %p135 = scmp.ne.s32.totalorder %s118, %s134
      %p136 = scmp.eq.s32.totalorder %s30, 0
      %p137 = por %p135, %p136
      %s138 = ssub.s32 %s32, %s39
      %p139 = scmp.eq.s32.totalorder %s138, 0
      %s141 = sadd.s32 %s140, 1
      %s142 = scalar_select %p139, %s140, %s141
      %p145 = pneg %p139
      %p146 = scmp.eq.s32.totalorder %s24, 1
      %p147 = por %p145, %p146
      %p148 = scmp.ne.s32.totalorder %s140, %s143
      %p149 = scmp.eq.s32.totalorder %s24, 0
      %p150 = por %p148, %p149
      %p151 = scmp.ne.s32.totalorder %s140, %s143
      %p152 = scmp.eq.s32.totalorder %s29, 1
      %p153 = por %p151, %p152
      %p154 = scmp.ne.s32.totalorder %s143, %s144
      %p155 = scmp.eq.s32.totalorder %s29, 0
      %p156 = por %p154, %p155
      %p157 = scmp.ne.s32.totalorder %s143, %s144
      %p158 = scmp.eq.s32.totalorder %s30, 1
      %p159 = por %p157, %p158
      %p161 = scmp.ne.s32.totalorder %s144, %s160
      %p162 = scmp.eq.s32.totalorder %s30, 0
      %p163 = por %p161, %p162
      %s164 = ssub.s32 %s32, %s39
      %p165 = scmp.eq.s32.totalorder %s164, 0
      %s167 = sadd.s32 %s166, 1
      %s168 = scalar_select %p165, %s166, %s167
      %p171 = pneg %p165
      %p172 = scmp.eq.s32.totalorder %s24, 1
      %p173 = por %p171, %p172
      %p174 = scmp.ne.s32.totalorder %s166, %s169
      %p175 = scmp.eq.s32.totalorder %s24, 0
      %p176 = por %p174, %p175
      %p177 = scmp.ne.s32.totalorder %s166, %s169
      %p178 = scmp.eq.s32.totalorder %s29, 1
      %p179 = por %p177, %p178
      %p180 = scmp.ne.s32.totalorder %s169, %s170
      %p181 = scmp.eq.s32.totalorder %s29, 0
      %p182 = por %p180, %p181
      %p183 = scmp.ne.s32.totalorder %s169, %s170
      %p184 = scmp.eq.s32.totalorder %s30, 1
      %p185 = por %p183, %p184
      %p187 = scmp.ne.s32.totalorder %s170, %s186
      %p188 = scmp.eq.s32.totalorder %s30, 0
      %p189 = por %p187, %p188
      %s190 = ssub.s32 %s32, %s39
      %p191 = scmp.eq.s32.totalorder %s190, 0
      %s193 = sadd.s32 %s192, 1
      %s194 = scalar_select %p191, %s192, %s193
      %p197 = pneg %p191
      %p198 = scmp.eq.s32.totalorder %s24, 1
      %p199 = por %p197, %p198
      %p200 = scmp.ne.s32.totalorder %s192, %s195
      %p201 = scmp.eq.s32.totalorder %s24, 0
      %p202 = por %p200, %p201
      %p203 = scmp.ne.s32.totalorder %s192, %s195
      %p204 = scmp.eq.s32.totalorder %s29, 1
      %p205 = por %p203, %p204
      %p206 = scmp.ne.s32.totalorder %s195, %s196
      %p207 = scmp.eq.s32.totalorder %s29, 0
      %p208 = por %p206, %p207
      %p209 = scmp.ne.s32.totalorder %s195, %s196
      %p210 = scmp.eq.s32.totalorder %s30, 1
      %p211 = por %p209, %p210
      %p213 = scmp.ne.s32.totalorder %s196, %s212
      %p214 = scmp.eq.s32.totalorder %s30, 0
      %p215 = por %p213, %p214
      %s216 = ssub.s32 %s32, %s39
      %p217 = scmp.eq.s32.totalorder %s216, 0
      %s219 = sadd.s32 %s218, 1
      %s220 = scalar_select %p217, %s218, %s219
      %p223 = pneg %p217
      %p224 = scmp.eq.s32.totalorder %s24, 1
      %p225 = por %p223, %p224
      %p226 = scmp.ne.s32.totalorder %s218, %s221
      %p227 = scmp.eq.s32.totalorder %s24, 0
      %p228 = por %p226, %p227
      %p229 = scmp.ne.s32.totalorder %s218, %s221
      %p230 = scmp.eq.s32.totalorder %s29, 1
      %p231 = por %p229, %p230
      %p232 = scmp.ne.s32.totalorder %s221, %s222
      %p233 = scmp.eq.s32.totalorder %s29, 0
      %p234 = por %p232, %p233
      %p235 = scmp.ne.s32.totalorder %s221, %s222
      %p236 = scmp.eq.s32.totalorder %s30, 1
      %p237 = por %p235, %p236
      %p239 = scmp.ne.s32.totalorder %s222, %s238
      %p240 = scmp.eq.s32.totalorder %s30, 0
      %p241 = por %p239, %p240
      %s242 = ssub.s32 %s32, %s39
      %p243 = scmp.eq.s32.totalorder %s242, 0
      %s245 = sadd.s32 %s244, 1
      %s246 = scalar_select %p243, %s244, %s245
      %p249 = pneg %p243
      %p250 = scmp.eq.s32.totalorder %s24, 1
      %p251 = por %p249, %p250
      %p252 = scmp.ne.s32.totalorder %s244, %s247
      %p253 = scmp.eq.s32.totalorder %s24, 0
      %p254 = por %p252, %p253
      %p255 = scmp.ne.s32.totalorder %s244, %s247
      %p256 = scmp.eq.s32.totalorder %s29, 1
      %p257 = por %p255, %p256
      %p258 = scmp.ne.s32.totalorder %s247, %s248
      %p259 = scmp.eq.s32.totalorder %s29, 0
      %p260 = por %p258, %p259
      %p261 = scmp.ne.s32.totalorder %s247, %s248
      %p262 = scmp.eq.s32.totalorder %s30, 1
      %p263 = por %p261, %p262
      %p265 = scmp.ne.s32.totalorder %s248, %s264
      %p266 = scmp.eq.s32.totalorder %s30, 0
      %p267 = por %p265, %p266
      %s268 = ssub.s32 %s32, %s39
      %p269 = scmp.eq.s32.totalorder %s268, 0
      %s271 = sadd.s32 %s270, 1
      %s272 = scalar_select %p269, %s270, %s271
      %p275 = pneg %p269
      %p276 = scmp.eq.s32.totalorder %s24, 1
      %p277 = por %p275, %p276
      %p278 = scmp.ne.s32.totalorder %s270, %s273
      %p279 = scmp.eq.s32.totalorder %s24, 0
      %p280 = por %p278, %p279
      %p281 = scmp.ne.s32.totalorder %s270, %s273
      %p282 = scmp.eq.s32.totalorder %s29, 1
      %p283 = por %p281, %p282
      %p284 = scmp.ne.s32.totalorder %s273, %s274
      %p285 = scmp.eq.s32.totalorder %s29, 0
      %p286 = por %p284, %p285
      %p287 = scmp.ne.s32.totalorder %s273, %s274
      %p288 = scmp.eq.s32.totalorder %s30, 1
      %p289 = por %p287, %p288
      %p291 = scmp.ne.s32.totalorder %s274, %s290
      %p292 = scmp.eq.s32.totalorder %s30, 0
      %p293 = por %p291, %p292
      %s294 = ssub.s32 %s32, %s39
      %p295 = scmp.eq.s32.totalorder %s294, 0
      %s297 = sadd.s32 %s296, 1
      %s298 = scalar_select %p295, %s296, %s297
      %p301 = pneg %p295
      %p302 = scmp.eq.s32.totalorder %s24, 1
      %p303 = por %p301, %p302
      %p304 = scmp.ne.s32.totalorder %s296, %s299
      %p305 = scmp.eq.s32.totalorder %s24, 0
      %p306 = por %p304, %p305
      %p307 = scmp.ne.s32.totalorder %s296, %s299
      %p308 = scmp.eq.s32.totalorder %s29, 1
      %p309 = por %p307, %p308
      %p310 = scmp.ne.s32.totalorder %s299, %s300
      %p311 = scmp.eq.s32.totalorder %s29, 0
      %p312 = por %p310, %p311
      %p313 = scmp.ne.s32.totalorder %s299, %s300
      %p314 = scmp.eq.s32.totalorder %s30, 1
      %p315 = por %p313, %p314
      %p317 = scmp.ne.s32.totalorder %s300, %s316
      %p318 = scmp.eq.s32.totalorder %s30, 0
      %p319 = por %p317, %p318
      %s320 = ssub.s32 %s32, %s39
      %p321 = scmp.eq.s32.totalorder %s320, 0
      %s323 = sadd.s32 %s322, 1
      %s324 = scalar_select %p321, %s322, %s323
      %p327 = pneg %p321
      %p328 = scmp.eq.s32.totalorder %s24, 1
      %p329 = por %p327, %p328
      %p330 = scmp.ne.s32.totalorder %s322, %s325
      %p331 = scmp.eq.s32.totalorder %s24, 0
      %p332 = por %p330, %p331
      %p333 = scmp.ne.s32.totalorder %s322, %s325
      %p334 = scmp.eq.s32.totalorder %s29, 1
      %p335 = por %p333, %p334
      %p336 = scmp.ne.s32.totalorder %s325, %s326
      %p337 = scmp.eq.s32.totalorder %s29, 0
      %p338 = por %p336, %p337
      %p339 = scmp.ne.s32.totalorder %s325, %s326
      %p340 = scmp.eq.s32.totalorder %s30, 1
      %p341 = por %p339, %p340
      %p343 = scmp.ne.s32.totalorder %s326, %s342
      %p344 = scmp.eq.s32.totalorder %s30, 0
      %p345 = por %p343, %p344
      %s346 = ssub.s32 %s32, %s39
      %p347 = scmp.eq.s32.totalorder %s346, 0
      %s349 = sadd.s32 %s348, 1
      %s350 = scalar_select %p347, %s348, %s349
      %p353 = pneg %p347
      %p354 = scmp.eq.s32.totalorder %s24, 1
      %p355 = por %p353, %p354
      %p356 = scmp.ne.s32.totalorder %s348, %s351
      %p357 = scmp.eq.s32.totalorder %s24, 0
      %p358 = por %p356, %p357
      %p359 = scmp.ne.s32.totalorder %s348, %s351
      %p360 = scmp.eq.s32.totalorder %s29, 1
      %p361 = por %p359, %p360
      %p362 = scmp.ne.s32.totalorder %s351, %s352
      %p363 = scmp.eq.s32.totalorder %s29, 0
      %p364 = por %p362, %p363
      %p365 = scmp.ne.s32.totalorder %s351, %s352
      %p366 = scmp.eq.s32.totalorder %s30, 1
      %p367 = por %p365, %p366
      %p369 = scmp.ne.s32.totalorder %s352, %s368
      %p370 = scmp.eq.s32.totalorder %s30, 0
      %p371 = por %p369, %p370
      %s372 = ssub.s32 %s32, %s39
      %p373 = scmp.eq.s32.totalorder %s372, 0
      %s375 = sadd.s32 %s374, 1
      %s376 = scalar_select %p373, %s374, %s375
      %p379 = pneg %p373
      %p380 = scmp.eq.s32.totalorder %s24, 1
      %p381 = por %p379, %p380
      %p382 = scmp.ne.s32.totalorder %s374, %s377
      %p383 = scmp.eq.s32.totalorder %s24, 0
      %p384 = por %p382, %p383
      %p385 = scmp.ne.s32.totalorder %s374, %s377
      %p386 = scmp.eq.s32.totalorder %s29, 1
      %p387 = por %p385, %p386
      %p388 = scmp.ne.s32.totalorder %s377, %s378
      %p389 = scmp.eq.s32.totalorder %s29, 0
      %p390 = por %p388, %p389
      %p391 = scmp.ne.s32.totalorder %s377, %s378
      %p392 = scmp.eq.s32.totalorder %s30, 1
      %p393 = por %p391, %p392
      %p395 = scmp.ne.s32.totalorder %s378, %s394
      %p396 = scmp.eq.s32.totalorder %s30, 0
      %p397 = por %p395, %p396
      %s398 = ssub.s32 %s32, %s39
      %p399 = scmp.eq.s32.totalorder %s398, 0
      %s401 = sadd.s32 %s400, 1
      %s402 = scalar_select %p399, %s400, %s401
      %p405 = pneg %p399
      %p406 = scmp.eq.s32.totalorder %s24, 1
      %p407 = por %p405, %p406
      %p408 = scmp.ne.s32.totalorder %s400, %s403
      %p409 = scmp.eq.s32.totalorder %s24, 0
      %p410 = por %p408, %p409
      %p411 = scmp.ne.s32.totalorder %s400, %s403
      %p412 = scmp.eq.s32.totalorder %s29, 1
      %p413 = por %p411, %p412
      %p414 = scmp.ne.s32.totalorder %s403, %s404
      %p415 = scmp.eq.s32.totalorder %s29, 0
      %p416 = por %p414, %p415
      %p417 = scmp.ne.s32.totalorder %s403, %s404
      %p418 = scmp.eq.s32.totalorder %s30, 1
      %p419 = por %p417, %p418
      %p421 = scmp.ne.s32.totalorder %s404, %s420
      %p422 = scmp.eq.s32.totalorder %s30, 0
      %p423 = por %p421, %p422
      %s425 = sadd.s32 %s424, 1
      %p428 = scmp.eq.s32.totalorder %s24, 1
      %p429 = scmp.ne.s32.totalorder %s424, %s426
      %p430 = scmp.eq.s32.totalorder %s24, 0
      %p431 = por %p429, %p430
      %p432 = scmp.ne.s32.totalorder %s424, %s426
      %p433 = scmp.eq.s32.totalorder %s29, 1
      %p434 = por %p432, %p433
      %p435 = scmp.ne.s32.totalorder %s426, %s427
      %p436 = scmp.eq.s32.totalorder %s29, 0
      %p437 = por %p435, %p436
      %p438 = scmp.ne.s32.totalorder %s426, %s427
      %p439 = scmp.eq.s32.totalorder %s30, 1
      %p440 = por %p438, %p439
      %p442 = scmp.ne.s32.totalorder %s427, %s441
      %p443 = scmp.eq.s32.totalorder %s30, 0
      %p444 = por %p442, %p443
      %s446 = sadd.s32 %s445, 1
      %p449 = scmp.eq.s32.totalorder %s24, 1
      %p450 = scmp.ne.s32.totalorder %s445, %s447
      %p451 = scmp.eq.s32.totalorder %s24, 0
      %p452 = por %p450, %p451
      %p453 = scmp.ne.s32.totalorder %s445, %s447
      %p454 = scmp.eq.s32.totalorder %s29, 1
      %p455 = por %p453, %p454
      %p456 = scmp.ne.s32.totalorder %s447, %s448
      %p457 = scmp.eq.s32.totalorder %s29, 0
      %p458 = por %p456, %p457
      %p459 = scmp.ne.s32.totalorder %s447, %s448
      %p460 = scmp.eq.s32.totalorder %s30, 1
      %p461 = por %p459, %p460
      %p463 = scmp.ne.s32.totalorder %s448, %s462
      %p464 = scmp.eq.s32.totalorder %s30, 0
      %p465 = por %p463, %p464
      %s466 = ssub.s32 %s31, %s43
      %p467 = scmp.eq.s32.totalorder %s466, 0
      %s469 = sadd.s32 %s468, 1
      %s470 = scalar_select %p467, %s468, %s469
      %p473 = pneg %p467
      %p474 = scmp.eq.s32.totalorder %s24, 1
      %p475 = por %p473, %p474
      %p476 = scmp.ne.s32.totalorder %s468, %s471
      %p477 = scmp.eq.s32.totalorder %s24, 0
      %p478 = por %p476, %p477
      %p479 = scmp.ne.s32.totalorder %s468, %s471
      %p480 = scmp.eq.s32.totalorder %s29, 1
      %p481 = por %p479, %p480
      %p482 = scmp.ne.s32.totalorder %s471, %s472
      %p483 = scmp.eq.s32.totalorder %s29, 0
      %p484 = por %p482, %p483
      %p485 = scmp.ne.s32.totalorder %s471, %s472
      %p486 = scmp.eq.s32.totalorder %s30, 1
      %p487 = por %p485, %p486
      %p489 = scmp.ne.s32.totalorder %s472, %s488
      %p490 = scmp.eq.s32.totalorder %s30, 0
      %p491 = por %p489, %p490
      %p492 = scmp.le.s32.totalorder 1, %s24
      %p493 = scmp.lt.s32.totalorder %s24, 3
      %p494 = pnand %p492, %p493
      %p495 = pneg %p494
      // Predicated region
      $region9: #{tpu_custom_call.1} parent=5 // pred_check
        _
      $region10: #{tpu_custom_call.1} parent=5 // pred_check_branch
        %497 = sbr.rel (%p494) target = $region12
      $region11: #{tpu_custom_call.1} parent=5 // pred_region
        %s498 = ssub.s32 %s24, 1
        // Predicated region
        $region13: #{tpu_custom_call.1} parent=11 // pred_check
          %p499 = pneg %p62
        $region14: #{tpu_custom_call.1} parent=11 // pred_check_branch
          %501 = sbr.rel (%p499) target = $region16
        $region15: #{tpu_custom_call.1} parent=11 // pred_region
          %s502 = smul.u32 2, %s33
          %p503 = scmp.lt.s32.totalorder %s502, 1
          %s504 = scalar_select %p503, %s502, 1
          %s505 = smul.addr %s504, 4
          %s506 = scalar_lea.vmem %s0, %s505
          %s507 = smul.u32 2, %s33
        $region16: #{tpu_custom_call.1} parent=11 // pred_fallthru
          _
        // Predicated region
        $region17: #{tpu_custom_call.1} parent=11 // pred_check
          %p508 = pneg %p83
        $region18: #{tpu_custom_call.1} parent=11 // pred_check_branch
          %510 = sbr.rel (%p508) target = $region20
        $region19: #{tpu_custom_call.1} parent=11 // pred_region
          _
        $region20: #{tpu_custom_call.1} parent=11 // pred_fallthru
          _
        // Predicated region
        $region21: #{tpu_custom_call.1} parent=11 // pred_check
          %p511 = pneg %p104
        $region22: #{tpu_custom_call.1} parent=11 // pred_check_branch
          %513 = sbr.rel (%p511) target = $region24
        $region23: #{tpu_custom_call.1} parent=11 // pred_region
          _
        $region24: #{tpu_custom_call.1} parent=11 // pred_fallthru
          _
        // Predicated region
        $region25: #{tpu_custom_call.1} parent=11 // pred_check
          %p514 = pneg %p437
        $region26: #{tpu_custom_call.1} parent=11 // pred_check_branch
          %516 = sbr.rel (%p514) target = $region28
        $region27: #{tpu_custom_call.1} parent=11 // pred_region
          _
        $region28: #{tpu_custom_call.1} parent=11 // pred_fallthru
          _
        // Predicated region
        $region29: #{tpu_custom_call.1} parent=11 // pred_check
          %p517 = pneg %p458
        $region30: #{tpu_custom_call.1} parent=11 // pred_check_branch
          %519 = sbr.rel (%p517) target = $region32
        $region31: #{tpu_custom_call.1} parent=11 // pred_region
          _
        $region32: #{tpu_custom_call.1} parent=11 // pred_fallthru
          _
      $region12: #{tpu_custom_call.1} parent=5 // pred_fallthru
        _
      %p520 = scmp.lt.s32.totalorder %s24, 2
      // Predicated region
      $region33: #{tpu_custom_call.1} parent=5 // pred_check
        %p521 = pneg %p520
      $region34: #{tpu_custom_call.1} parent=5 // pred_check_branch
        %523 = sbr.rel (%p521) target = $region36
      $region35: #{tpu_custom_call.1} parent=5 // pred_region
        // Predicated region
        $region37: #{tpu_custom_call.1} parent=35 // pred_check
          %p524 = pneg %p124
        $region38: #{tpu_custom_call.1} parent=35 // pred_check_branch
          %526 = sbr.rel (%p524) target = $region40
        $region39: #{tpu_custom_call.1} parent=35 // pred_region
          %p527 = scmp.lt.s32.totalorder %s32, 1
          %s528 = scalar_select %p527, %s32, 1
          %s529 = scalar_lea.vmem %s3, %s528
        $region40: #{tpu_custom_call.1} parent=35 // pred_fallthru
          _
        // Predicated region
        $region41: #{tpu_custom_call.1} parent=35 // pred_check
          %p530 = pneg %p150
        $region42: #{tpu_custom_call.1} parent=35 // pred_check_branch
          %532 = sbr.rel (%p530) target = $region44
        $region43: #{tpu_custom_call.1} parent=35 // pred_region
          %p533 = scmp.lt.s32.totalorder %s32, 1
          %s534 = scalar_select %p533, %s32, 1
          %s535 = scalar_lea.vmem %s4, %s534
        $region44: #{tpu_custom_call.1} parent=35 // pred_fallthru
          _
        // Predicated region
        $region45: #{tpu_custom_call.1} parent=35 // pred_check
          %p536 = pneg %p176
        $region46: #{tpu_custom_call.1} parent=35 // pred_check_branch
          %538 = sbr.rel (%p536) target = $region48
        $region47: #{tpu_custom_call.1} parent=35 // pred_region
          %p539 = scmp.lt.s32.totalorder %s32, 1
          %s540 = scalar_select %p539, %s32, 1
          %s541 = smul.addr %s540, 4
          %s542 = smul.addr %s541, 4
          %s543 = scalar_lea.vmem %s5, %s542
        $region48: #{tpu_custom_call.1} parent=35 // pred_fallthru
          _
        // Predicated region
        $region49: #{tpu_custom_call.1} parent=35 // pred_check
          %p544 = pneg %p202
        $region50: #{tpu_custom_call.1} parent=35 // pred_check_branch
          %546 = sbr.rel (%p544) target = $region52
        $region51: #{tpu_custom_call.1} parent=35 // pred_region
          %p547 = scmp.lt.s32.totalorder %s32, 1
          %s548 = scalar_select %p547, %s32, 1
          %s549 = scalar_lea.vmem %s6, %s548
        $region52: #{tpu_custom_call.1} parent=35 // pred_fallthru
          _
        // Predicated region
        $region53: #{tpu_custom_call.1} parent=35 // pred_check
          %p550 = pneg %p228
        $region54: #{tpu_custom_call.1} parent=35 // pred_check_branch
          %552 = sbr.rel (%p550) target = $region56
        $region55: #{tpu_custom_call.1} parent=35 // pred_region
          %p553 = scmp.lt.s32.totalorder %s32, 1
          %s554 = scalar_select %p553, %s32, 1
          %s555 = smul.addr %s554, 4
          %s556 = smul.addr %s555, 4
          %s557 = scalar_lea.vmem %s7, %s556
        $region56: #{tpu_custom_call.1} parent=35 // pred_fallthru
          _
        // Predicated region
        $region57: #{tpu_custom_call.1} parent=35 // pred_check
          %p558 = pneg %p254
        $region58: #{tpu_custom_call.1} parent=35 // pred_check_branch
          %560 = sbr.rel (%p558) target = $region60
        $region59: #{tpu_custom_call.1} parent=35 // pred_region
          %p561 = scmp.lt.s32.totalorder %s32, 1
          %s562 = scalar_select %p561, %s32, 1
          %s563 = scalar_lea.vmem %s8, %s562
        $region60: #{tpu_custom_call.1} parent=35 // pred_fallthru
          _
        // Predicated region
        $region61: #{tpu_custom_call.1} parent=35 // pred_check
          %p564 = pneg %p280
        $region62: #{tpu_custom_call.1} parent=35 // pred_check_branch
          %566 = sbr.rel (%p564) target = $region64
        $region63: #{tpu_custom_call.1} parent=35 // pred_region
          %p567 = scmp.lt.s32.totalorder %s32, 1
          %s568 = scalar_select %p567, %s32, 1
          %s569 = scalar_lea.vmem %s9, %s568
        $region64: #{tpu_custom_call.1} parent=35 // pred_fallthru
          _
        // Predicated region
        $region65: #{tpu_custom_call.1} parent=35 // pred_check
          %p570 = pneg %p306
        $region66: #{tpu_custom_call.1} parent=35 // pred_check_branch
          %572 = sbr.rel (%p570) target = $region68
        $region67: #{tpu_custom_call.1} parent=35 // pred_region
          %p573 = scmp.lt.s32.totalorder %s32, 1
          %s574 = scalar_select %p573, %s32, 1
          %s575 = scalar_lea.vmem %s10, %s574
        $region68: #{tpu_custom_call.1} parent=35 // pred_fallthru
          _
        // Predicated region
        $region69: #{tpu_custom_call.1} parent=35 // pred_check
          %p576 = pneg %p332
        $region70: #{tpu_custom_call.1} parent=35 // pred_check_branch
          %578 = sbr.rel (%p576) target = $region72
        $region71: #{tpu_custom_call.1} parent=35 // pred_region
          %p579 = scmp.lt.s32.totalorder %s32, 1
          %s580 = scalar_select %p579, %s32, 1
          %s581 = smul.addr %s580, 4
          %s582 = smul.addr %s581, 4
          %s583 = scalar_lea.vmem %s11, %s582
        $region72: #{tpu_custom_call.1} parent=35 // pred_fallthru
          _
        // Predicated region
        $region73: #{tpu_custom_call.1} parent=35 // pred_check
          %p584 = pneg %p358
        $region74: #{tpu_custom_call.1} parent=35 // pred_check_branch
          %586 = sbr.rel (%p584) target = $region76
        $region75: #{tpu_custom_call.1} parent=35 // pred_region
          %p587 = scmp.lt.s32.totalorder %s32, 1
          %s588 = scalar_select %p587, %s32, 1
          %s589 = scalar_lea.vmem %s12, %s588
        $region76: #{tpu_custom_call.1} parent=35 // pred_fallthru
          _
        // Predicated region
        $region77: #{tpu_custom_call.1} parent=35 // pred_check
          %p590 = pneg %p384
        $region78: #{tpu_custom_call.1} parent=35 // pred_check_branch
          %592 = sbr.rel (%p590) target = $region80
        $region79: #{tpu_custom_call.1} parent=35 // pred_region
          %p593 = scmp.lt.s32.totalorder %s32, 1
          %s594 = scalar_select %p593, %s32, 1
          %s595 = smul.addr %s594, 16
          %s596 = smul.addr %s595, 4
          %s597 = scalar_lea.vmem %s13, %s596
        $region80: #{tpu_custom_call.1} parent=35 // pred_fallthru
          _
        // Predicated region
        $region81: #{tpu_custom_call.1} parent=35 // pred_check
          %p598 = pneg %p410
        $region82: #{tpu_custom_call.1} parent=35 // pred_check_branch
          %600 = sbr.rel (%p598) target = $region84
        $region83: #{tpu_custom_call.1} parent=35 // pred_region
          %p601 = scmp.lt.s32.totalorder %s32, 1
          %s602 = scalar_select %p601, %s32, 1
          %s603 = scalar_lea.vmem %s14, %s602
        $region84: #{tpu_custom_call.1} parent=35 // pred_fallthru
          _
      $region36: #{tpu_custom_call.1} parent=5 // pred_fallthru
        _
      %p604 = scmp.le.s32.totalorder 1, %s24
      %p605 = scmp.lt.s32.totalorder %s24, 3
      %p606 = pnand %p604, %p605
      %p607 = pneg %p606
      // Predicated region
      $region85: #{tpu_custom_call.1} parent=5 // pred_check
        _
      $region86: #{tpu_custom_call.1} parent=5 // pred_check_branch
        %609 = sbr.rel (%p606) target = $region88
      $region87: #{tpu_custom_call.1} parent=5 // pred_region
        %s610 = ssub.s32 %s24, 1
        %s611 = smul.u32 2, %s33
        %p612 = scmp.lt.s32.totalorder %s611, 1
        %s613 = scalar_select %p612, %s611, 1
        %s614 = smul.addr %s613, 4
        %s615 = scalar_lea.vmem %s0, %s614
        %p616 = pneg %p62
        %p617 = pneg %p59
        %p618 = pneg %p83
        %p619 = pneg %p80
        %p620 = pneg %p104
        %p621 = pneg %p101
        %p622 = scmp.lt.s32.totalorder %s34, 1
        %s623 = scalar_select %p622, %s34, 1
        %s624 = scalar_lea.vmem %s3, %s623
        %p625 = pneg %p130
        %p626 = pneg %p127
        %p627 = scmp.lt.s32.totalorder %s34, 1
        %s628 = scalar_select %p627, %s34, 1
        %s629 = scalar_lea.vmem %s4, %s628
        %p630 = pneg %p156
        %p631 = pneg %p153
        %p632 = scmp.lt.s32.totalorder %s34, 1
        %s633 = scalar_select %p632, %s34, 1
        %s634 = smul.addr %s633, 4
        %s635 = smul.addr %s634, 4
        %s636 = scalar_lea.vmem %s5, %s635
        %p637 = pneg %p182
        %p638 = pneg %p179
        %p639 = scmp.lt.s32.totalorder %s34, 1
        %s640 = scalar_select %p639, %s34, 1
        %s641 = scalar_lea.vmem %s6, %s640
        %p642 = pneg %p208
        %p643 = pneg %p205
        %p644 = scmp.lt.s32.totalorder %s34, 1
        %s645 = scalar_select %p644, %s34, 1
        %s646 = smul.addr %s645, 4
        %s647 = smul.addr %s646, 4
        %s648 = scalar_lea.vmem %s7, %s647
        %p649 = pneg %p234
        %p650 = pneg %p231
        %p651 = scmp.lt.s32.totalorder %s34, 1
        %s652 = scalar_select %p651, %s34, 1
        %s653 = scalar_lea.vmem %s8, %s652
        %p654 = pneg %p260
        %p655 = pneg %p257
        %p656 = scmp.lt.s32.totalorder %s34, 1
        %s657 = scalar_select %p656, %s34, 1
        %s658 = scalar_lea.vmem %s9, %s657
        %p659 = pneg %p286
        %p660 = pneg %p283
        %p661 = scmp.lt.s32.totalorder %s34, 1
        %s662 = scalar_select %p661, %s34, 1
        %s663 = scalar_lea.vmem %s10, %s662
        %p664 = pneg %p312
        %p665 = pneg %p309
        %p666 = scmp.lt.s32.totalorder %s34, 1
        %s667 = scalar_select %p666, %s34, 1
        %s668 = smul.addr %s667, 4
        %s669 = smul.addr %s668, 4
        %s670 = scalar_lea.vmem %s11, %s669
        %p671 = pneg %p338
        %p672 = pneg %p335
        %p673 = scmp.lt.s32.totalorder %s34, 1
        %s674 = scalar_select %p673, %s34, 1
        %s675 = scalar_lea.vmem %s12, %s674
        %p676 = pneg %p364
        %p677 = pneg %p361
        %p678 = scmp.lt.s32.totalorder %s34, 1
        %s679 = scalar_select %p678, %s34, 1
        %s680 = smul.addr %s679, 16
        %s681 = smul.addr %s680, 4
        %s682 = scalar_lea.vmem %s13, %s681
        %p683 = pneg %p390
        %p684 = pneg %p387
        %p685 = scmp.lt.s32.totalorder %s34, 1
        %s686 = scalar_select %p685, %s34, 1
        %s687 = scalar_lea.vmem %s14, %s686
        %p688 = pneg %p416
        %p689 = pneg %p413
        %p690 = pneg %p437
        %p691 = pneg %p434
        %p692 = pneg %p458
        %p693 = pneg %p455
        %p694 = pneg %p484
        %p695 = pneg %p481
        %s696 = smul.u32 2, %s33
        %p697 = scmp.lt.s32.totalorder %s696, 1
        %s698 = scalar_select %p697, %s696, 1
        %s699 = smul.addr %s698, 4
        %s700 = scalar_lea.vmem %s0, %s699
        %s701 = smul.u32 2, %s33
        %p702 = scmp.lt.s32.totalorder %s34, 1
        %s703 = scalar_select %p702, %s34, 1
        %s704 = scalar_lea.vmem %s3, %s703
        %p705 = scmp.lt.s32.totalorder %s34, 1
        %s706 = scalar_select %p705, %s34, 1
        %s707 = scalar_lea.vmem %s4, %s706
        %p708 = scmp.lt.s32.totalorder %s34, 1
        %s709 = scalar_select %p708, %s34, 1
        %s710 = smul.addr %s709, 4
        %s711 = smul.addr %s710, 4
        %s712 = scalar_lea.vmem %s5, %s711
        %p713 = scmp.lt.s32.totalorder %s34, 1
        %s714 = scalar_select %p713, %s34, 1
        %s715 = scalar_lea.vmem %s6, %s714
        %p716 = scmp.lt.s32.totalorder %s34, 1
        %s717 = scalar_select %p716, %s34, 1
        %s718 = smul.addr %s717, 4
        %s719 = smul.addr %s718, 4
        %s720 = scalar_lea.vmem %s7, %s719
        %p721 = scmp.lt.s32.totalorder %s34, 1
        %s722 = scalar_select %p721, %s34, 1
        %s723 = scalar_lea.vmem %s8, %s722
        %p724 = scmp.lt.s32.totalorder %s34, 1
        %s725 = scalar_select %p724, %s34, 1
        %s726 = scalar_lea.vmem %s9, %s725
        %p727 = scmp.lt.s32.totalorder %s34, 1
        %s728 = scalar_select %p727, %s34, 1
        %s729 = scalar_lea.vmem %s10, %s728
        %p730 = scmp.lt.s32.totalorder %s34, 1
        %s731 = scalar_select %p730, %s34, 1
        %s732 = smul.addr %s731, 4
        %s733 = smul.addr %s732, 4
        %s734 = scalar_lea.vmem %s11, %s733
        %p735 = scmp.lt.s32.totalorder %s34, 1
        %s736 = scalar_select %p735, %s34, 1
        %s737 = scalar_lea.vmem %s12, %s736
        %p738 = scmp.lt.s32.totalorder %s34, 1
        %s739 = scalar_select %p738, %s34, 1
        %s740 = smul.addr %s739, 16
        %s741 = smul.addr %s740, 4
        %s742 = scalar_lea.vmem %s13, %s741
        %p743 = scmp.lt.s32.totalorder %s34, 1
        %s744 = scalar_select %p743, %s34, 1
        %s745 = scalar_lea.vmem %s14, %s744
        %s746 = smul.u32 2, %s33
        %p748 = scmp.eq.s32.totalorder %s34, 0
        // Predicated region
        $region89: #{tpu_custom_call.1} parent=87 // pred_check
          %p749 = pneg %p748
        $region90: #{tpu_custom_call.1} parent=87 // pred_check_branch
          %751 = sbr.rel (%p749) target = $region92
        $region91: #{tpu_custom_call.1} parent=87 // pred_region
          %v752 = vld [vmem:[%s700] sm:$0xf]
          %v753 = vld [vmem:[%s700 + $0x4] sm:$0xf]
          %v754 = vunpack.c.l.bf16 %v752
          %v755 = vunpack.c.l.bf16 %v753
          %v756 = vld [vmem:[%s1] sm:$0xff]
          %v757 = vadd.f32 %v754, %v756
          %v758 = vadd.f32 %v755, %v756
          %vm759 = vcmask 261120
          %760 = vst.msk [vmem:[#allocation2] sm:$0xff] %vm759, %v757
          %761 = vst.msk [vmem:[#allocation2 + $0x8] sm:$0xff] %vm759, %v758
        $region92: #{tpu_custom_call.1} parent=87 // pred_fallthru
          _
        %v762 = vld [vmem:[#allocation2] sm:$0xff]
        %v763 = vld [vmem:[#allocation2 + $0x8] sm:$0xff]
        %v764 = vld [vmem:[%s704] sm:$0x1]
        %v765 = vld [vmem:[%s707] sm:$0x1]
        %vm766 = vcmask 261120
        %v767 = vsel %vm766, %v762, 0.0
        %768 = vadd.xlane.f32.xlu0 %v767
        %v769 = vpop.xlane.xlu0 %768
        %v770 = vsel %vm766, %v763, 0.0
        %771 = vadd.xlane.f32.xlu0 %v770
        %v772 = vpop.xlane.xlu0 %771
        %v773 = vrcp.pop 32.0
        %v774 = vmul.f32 32.0, %v773
        %v775 = vsub.f32 1.0, %v774
        %v776 = vmul.f32 %v773, %v775
        %v777 = vadd.f32 %v773, %v776
        %vm778 = vweird.f32 %v773
        %v779 = vsel %vm778, %v773, %v777
        %v780 = vmul.f32 %v769, %v779
        %v781 = vmul.f32 %v772, %v779
        %v782 = vsub.f32 %v762, %v780
        %v783 = vsub.f32 %v763, %v781
        %v784 = vmul.f32 %v782, %v782
        %v785 = vmul.f32 %v783, %v783
        %v786 = vsel %vm766, %v784, 0.0
        %787 = vadd.xlane.f32.xlu0 %v786
        %v788 = vpop.xlane.xlu0 %787
        %v789 = vsel %vm766, %v785, 0.0
        %790 = vadd.xlane.f32.xlu0 %v789
        %v791 = vpop.xlane.xlu0 %790
        %v792 = vmul.f32 %v788, %v779
        %v793 = vmul.f32 %v791, %v779
        %v794 = vadd.f32 %v792, 1e-05
        %v795 = vadd.f32 %v793, 1e-05
        %v796 = vrsqrt.pop %v794
        %v797 = vmul.f32 %v796, %v794
        %v798 = vmul.f32 %v797, %v796
        %v799 = vmul.f32 0.5, %v798
        %v800 = vsub.f32 1.5, %v799
        %v801 = vmul.f32 %v796, %v800
        %vm802 = vweird.f32 %v794
        %vm803 = vweird.f32 %v796
        %vm804 = vmor %vm802, %vm803
        %v805 = vsel %vm804, %v796, %v801
        %v806 = vrsqrt.pop %v795
        %v807 = vmul.f32 %v806, %v795
        %v808 = vmul.f32 %v807, %v806
        %v809 = vmul.f32 0.5, %v808
        %v810 = vsub.f32 1.5, %v809
        %v811 = vmul.f32 %v806, %v810
        %vm812 = vweird.f32 %v795
        %vm813 = vweird.f32 %v806
        %vm814 = vmor %vm812, %vm813
        %v815 = vsel %vm814, %v806, %v811
        %v816 = vmul.f32 %v782, %v805
        %v817 = vmul.f32 %v783, %v815
        %v819 = vperm.slane %v764, 0
        %v821 = vmul.f32 %v816, %v819
        %v822 = vmul.f32 %v817, %v819
        %v824 = vperm.slane %v765, 0
        %v826 = vadd.f32 %v821, %v824
        %v827 = vadd.f32 %v822, %v824
        %v828 = vpack.c.bf16 %v827, %v826
        %v829 = vld [vmem:[%s712] sm:$0xf]
        %v830 = vld [vmem:[%s712 + $0x4] sm:$0xf]
        %v831 = vld [vmem:[%s712 + $0x8] sm:$0xf]
        %v832 = vld [vmem:[%s712 + $0xc] sm:$0xf]
        %v833 = vld [vmem:[%s715] sm:$0x1]
        %v835 = vperm.slane %v833, 0
        %v841 = vunpack.c.l.b16 %v829
        %v842 = vunpack.c.l.b16 %v830
        %v843 = vunpack.c.l.b16 %v831
        %v844 = vunpack.c.l.b16 %v832
        %v845 = vpack.c.b16 %v842, %v841
        %v846 = vpack.c.b16 %v844, %v843
        %v850 = vsel %vm766, %v828, 0
        %852 = vmatpush.bf16.msra.mxu0 0
        %853 = vmatpush.bf16.msra.mxu0 0
        %854 = vmatpush.bf16.msra.mxu0 0
        %855 = vmatpush.bf16.msra.mxu0 0
        %856 = vmatpush.bf16.msra.mxu0 0
        %857 = vmatpush.bf16.msra.mxu0 0
        %858 = vmatpush.bf16.msra.mxu0 %v846
        %859 = vmatpush.bf16.msra.mxu0 %v845
        %860 = vmatmul.bf16.gmra.mxu0 %v850
        %v861 = vpop.f32.mrf.mxu0
        %v862 = vadd.f32 %v835, %v861
        %v863 = vpop.f32.mrf.mxu0
        %v864 = vadd.f32 %v835, %v863
        %865 = vdwg.mxu0
        %v866 = vmul.f32 %v862, 0.35355338
        %v867 = vmul.f32 %v864, 0.35355338
        %v868 = vld [vmem:[%s2] sm:$0xff]
        %870 = vrot.lane.b32.xlu0 %v866, 120
        %v871 = vpop.permute.xlu0 %870
        %873 = vrot.lane.b32.xlu0 %v866, 112
        %v874 = vpop.permute.xlu0 %873
        %876 = vrot.lane.b32.xlu0 %v866, 104
        %v877 = vpop.permute.xlu0 %876
        %v879 = vpack.c.bf16 %v866, %v866
        %v880 = vpack.c.bf16 %v871, %v871
        %v881 = vpack.c.bf16 %v874, %v874
        %v882 = vpack.c.bf16 %v877, %v877
        %884 = vrot.lane.b32.xlu0 %v862, 120
        %v885 = vpop.permute.xlu0 %884
        %887 = vrot.lane.b32.xlu0 %v862, 112
        %v888 = vpop.permute.xlu0 %887
        %890 = vrot.lane.b32.xlu0 %v862, 104
        %v891 = vpop.permute.xlu0 %890
        %v893 = vpack.c.bf16 %v862, %v862
        %v894 = vpack.c.bf16 %v885, %v885
        %v895 = vpack.c.bf16 %v888, %v888
        %v896 = vpack.c.bf16 %v891, %v891
        %v898 = vunpack.c.l.b16 %v893
        %v899 = vpack.c.b16 %v898, %v898
        %900 = vrot.lane.b32.xlu0 %v899, 96
        %v901 = vpop.permute.xlu0 %900
        %vm902 = vcmask 64512
        %v904 = vsel %vm902, %v879, 0
        %v907 = vsel %vm902, %v901, 0
        %909 = vmatpush.bf16.xpose.msra.mxu0 0
        %910 = vmatpush.bf16.xpose.msra.mxu0 0
        %911 = vmatpush.bf16.xpose.msra.mxu0 0
        %912 = vmatpush.bf16.xpose.msra.mxu0 0
        %913 = vmatpush.bf16.xpose.msra.mxu0 0
        %914 = vmatpush.bf16.xpose.msra.mxu0 0
        %915 = vmatpush.bf16.xpose.msra.mxu0 0
        %916 = vmatpush.bf16.xpose.msra.mxu0 %v907
        %917 = vmatmul.bf16.gmra.mxu0 %v904
        %v918 = vpop.f32.mrf.mxu0
        %v919 = vadd.f32 %v868, %v918
        %v920 = vpop.f32.mrf.mxu0
        %921 = vdwg.mxu0
        %v923 = vunpack.c.l.b16 %v894
        %v924 = vpack.c.b16 %v923, %v923
        %925 = vrot.lane.b32.xlu0 %v924, 96
        %v926 = vpop.permute.xlu0 %925
        %v928 = vsel %vm902, %v880, 0
        %v931 = vsel %vm902, %v926, 0
        %933 = vmatpush.bf16.xpose.msra.mxu0 0
        %934 = vmatpush.bf16.xpose.msra.mxu0 0
        %935 = vmatpush.bf16.xpose.msra.mxu0 0
        %936 = vmatpush.bf16.xpose.msra.mxu0 0
        %937 = vmatpush.bf16.xpose.msra.mxu0 0
        %938 = vmatpush.bf16.xpose.msra.mxu0 0
        %939 = vmatpush.bf16.xpose.msra.mxu0 0
        %940 = vmatpush.bf16.xpose.msra.mxu0 %v931
        %941 = vmatmul.bf16.gmra.mxu0 %v928
        %v942 = vpop.f32.mrf.mxu0
        %v943 = vadd.f32 %v868, %v942
        %v944 = vpop.f32.mrf.mxu0
        %945 = vdwg.mxu0
        %v947 = vunpack.c.l.b16 %v895
        %v948 = vpack.c.b16 %v947, %v947
        %949 = vrot.lane.b32.xlu0 %v948, 96
        %v950 = vpop.permute.xlu0 %949
        %v952 = vsel %vm902, %v881, 0
        %v955 = vsel %vm902, %v950, 0
        %957 = vmatpush.bf16.xpose.msra.mxu0 0
        %958 = vmatpush.bf16.xpose.msra.mxu0 0
        %959 = vmatpush.bf16.xpose.msra.mxu0 0
        %960 = vmatpush.bf16.xpose.msra.mxu0 0
        %961 = vmatpush.bf16.xpose.msra.mxu0 0
        %962 = vmatpush.bf16.xpose.msra.mxu0 0
        %963 = vmatpush.bf16.xpose.msra.mxu0 0
        %964 = vmatpush.bf16.xpose.msra.mxu0 %v955
        %965 = vmatmul.bf16.gmra.mxu0 %v952
        %v966 = vpop.f32.mrf.mxu0
        %v967 = vadd.f32 %v868, %v966
        %v968 = vpop.f32.mrf.mxu0
        %969 = vdwg.mxu0
        %v971 = vunpack.c.l.b16 %v896
        %v972 = vpack.c.b16 %v971, %v971
        %973 = vrot.lane.b32.xlu0 %v972, 96
        %v974 = vpop.permute.xlu0 %973
        %v976 = vsel %vm902, %v882, 0
        %v979 = vsel %vm902, %v974, 0
        %981 = vmatpush.bf16.xpose.msra.mxu0 0
        %982 = vmatpush.bf16.xpose.msra.mxu0 0
        %983 = vmatpush.bf16.xpose.msra.mxu0 0
        %984 = vmatpush.bf16.xpose.msra.mxu0 0
        %985 = vmatpush.bf16.xpose.msra.mxu0 0
        %986 = vmatpush.bf16.xpose.msra.mxu0 0
        %987 = vmatpush.bf16.xpose.msra.mxu0 0
        %988 = vmatpush.bf16.xpose.msra.mxu0 %v979
        %989 = vmatmul.bf16.gmra.mxu0 %v976
        %v990 = vpop.f32.mrf.mxu0
        %v991 = vadd.f32 %v868, %v990
        %v992 = vpop.f32.mrf.mxu0
        %993 = vdwg.mxu0
        %v994 = vsel %vm902, %v919, -inf
        %995 = vmax.xlane.f32.xlu0 %v994
        %v996 = vpop.xlane.xlu0 %995
        %v997 = vsel %vm902, %v943, -inf
        %998 = vmax.xlane.f32.xlu0 %v997
        %v999 = vpop.xlane.xlu0 %998
        %v1000 = vsel %vm902, %v967, -inf
        %1001 = vmax.xlane.f32.xlu0 %v1000
        %v1002 = vpop.xlane.xlu0 %1001
        %v1003 = vsel %vm902, %v991, -inf
        %1004 = vmax.xlane.f32.xlu0 %v1003
        %v1005 = vpop.xlane.xlu0 %1004
        %v1006 = vmax.f32 %v996, -1e+30
        %v1007 = vmax.f32 %v999, -1e+30
        %v1008 = vmax.f32 %v1002, -1e+30
        %v1009 = vmax.f32 %v1005, -1e+30
        %v1010 = vsub.f32 -1e+30, %v1006
        %v1011 = vsub.f32 -1e+30, %v1007
        %v1012 = vsub.f32 -1e+30, %v1008
        %v1013 = vsub.f32 -1e+30, %v1009
        %v1014 = vmul.f32 %v1010, 1.442695
        %v1015 = vpow.pop %v1014
        %v1016 = vmul.f32 %v1011, 1.442695
        %v1017 = vpow.pop %v1016
        %v1018 = vmul.f32 %v1012, 1.442695
        %v1019 = vpow.pop %v1018
        %v1020 = vmul.f32 %v1013, 1.442695
        %v1021 = vpow.pop %v1020
        %v1022 = vsub.f32 %v919, %v1006
        %v1023 = vsub.f32 %v943, %v1007
        %v1024 = vsub.f32 %v967, %v1008
        %v1025 = vsub.f32 %v991, %v1009
        %v1026 = vmul.f32 %v1022, 1.442695
        %v1027 = vpow.pop %v1026
        %v1028 = vmul.f32 %v1023, 1.442695
        %v1029 = vpow.pop %v1028
        %v1030 = vmul.f32 %v1024, 1.442695
        %v1031 = vpow.pop %v1030
        %v1032 = vmul.f32 %v1025, 1.442695
        %v1033 = vpow.pop %v1032
        %v1034 = vmul.f32 %v1015, 0.0
        %v1035 = vmul.f32 %v1017, 0.0
        %v1036 = vmul.f32 %v1019, 0.0
        %v1037 = vmul.f32 %v1021, 0.0
        %v1038 = vsel %vm902, %v1027, 0.0
        %1039 = vadd.xlane.f32.xlu0 %v1038
        %v1040 = vpop.xlane.xlu0 %1039
        %v1041 = vsel %vm902, %v1029, 0.0
        %1042 = vadd.xlane.f32.xlu0 %v1041
        %v1043 = vpop.xlane.xlu0 %1042
        %v1044 = vsel %vm902, %v1031, 0.0
        %1045 = vadd.xlane.f32.xlu0 %v1044
        %v1046 = vpop.xlane.xlu0 %1045
        %v1047 = vsel %vm902, %v1033, 0.0
        %1048 = vadd.xlane.f32.xlu0 %v1047
        %v1049 = vpop.xlane.xlu0 %1048
        %v1050 = vadd.f32 %v1034, %v1040
        %v1051 = vadd.f32 %v1035, %v1043
        %v1052 = vadd.f32 %v1036, %v1046
        %v1053 = vadd.f32 %v1037, %v1049
        %v1054 = vpack.c.bf16 %v1027, %v1027
        %v1055 = vpack.c.bf16 %v1029, %v1029
        %v1056 = vpack.c.bf16 %v1031, %v1031
        %v1057 = vpack.c.bf16 %v1033, %v1033
        %1058 = vrot.lane.b32.xlu0 %v899, 64
        %v1059 = vpop.permute.xlu0 %1058
        %v1061 = vsel %vm902, %v1054, 0
        %vm1063 = vcmask 1043456
        %v1065 = vsel %vm1063, %v1059, 0
        %1067 = vmatpush.bf16.msra.mxu0 0
        %1068 = vmatpush.bf16.msra.mxu0 0
        %1069 = vmatpush.bf16.msra.mxu0 0
        %1070 = vmatpush.bf16.msra.mxu0 0
        %1071 = vmatpush.bf16.msra.mxu0 0
        %1072 = vmatpush.bf16.msra.mxu0 0
        %1073 = vmatpush.bf16.msra.mxu0 0
        %1074 = vmatpush.bf16.msra.mxu0 %v1065
        %1075 = vmatmul.bf16.gmra.mxu0 %v1061
        %v1076 = vpop.f32.mrf.mxu0
        %v1077 = vadd.f32 0.0, %v1076
        %v1078 = vpop.f32.mrf.mxu0
        %1079 = vdwg.mxu0
        %1080 = vrot.lane.b32.xlu0 %v924, 64
        %v1081 = vpop.permute.xlu0 %1080
        %v1083 = vsel %vm902, %v1055, 0
        %v1086 = vsel %vm1063, %v1081, 0
        %1088 = vmatpush.bf16.msra.mxu0 0
        %1089 = vmatpush.bf16.msra.mxu0 0
        %1090 = vmatpush.bf16.msra.mxu0 0
        %1091 = vmatpush.bf16.msra.mxu0 0
        %1092 = vmatpush.bf16.msra.mxu0 0
        %1093 = vmatpush.bf16.msra.mxu0 0
        %1094 = vmatpush.bf16.msra.mxu0 0
        %1095 = vmatpush.bf16.msra.mxu0 %v1086
        %1096 = vmatmul.bf16.gmra.mxu0 %v1083
        %v1097 = vpop.f32.mrf.mxu0
        %v1098 = vadd.f32 0.0, %v1097
        %v1099 = vpop.f32.mrf.mxu0
        %1100 = vdwg.mxu0
        %1101 = vrot.lane.b32.xlu0 %v948, 64
        %v1102 = vpop.permute.xlu0 %1101
        %v1104 = vsel %vm902, %v1056, 0
        %v1107 = vsel %vm1063, %v1102, 0
        %1109 = vmatpush.bf16.msra.mxu0 0
        %1110 = vmatpush.bf16.msra.mxu0 0
        %1111 = vmatpush.bf16.msra.mxu0 0
        %1112 = vmatpush.bf16.msra.mxu0 0
        %1113 = vmatpush.bf16.msra.mxu0 0
        %1114 = vmatpush.bf16.msra.mxu0 0
        %1115 = vmatpush.bf16.msra.mxu0 0
        %1116 = vmatpush.bf16.msra.mxu0 %v1107
        %1117 = vmatmul.bf16.gmra.mxu0 %v1104
        %v1118 = vpop.f32.mrf.mxu0
        %v1119 = vadd.f32 0.0, %v1118
        %v1120 = vpop.f32.mrf.mxu0
        %1121 = vdwg.mxu0
        %1122 = vrot.lane.b32.xlu0 %v972, 64
        %v1123 = vpop.permute.xlu0 %1122
        %v1125 = vsel %vm902, %v1057, 0
        %v1128 = vsel %vm1063, %v1123, 0
        %1130 = vmatpush.bf16.msra.mxu0 0
        %1131 = vmatpush.bf16.msra.mxu0 0
        %1132 = vmatpush.bf16.msra.mxu0 0
        %1133 = vmatpush.bf16.msra.mxu0 0
        %1134 = vmatpush.bf16.msra.mxu0 0
        %1135 = vmatpush.bf16.msra.mxu0 0
        %1136 = vmatpush.bf16.msra.mxu0 0
        %1137 = vmatpush.bf16.msra.mxu0 %v1128
        %1138 = vmatmul.bf16.gmra.mxu0 %v1125
        %v1139 = vpop.f32.mrf.mxu0
        %v1140 = vadd.f32 0.0, %v1139
        %v1141 = vpop.f32.mrf.mxu0
        %1142 = vdwg.mxu0
        %v1143 = vadd.f32 %v1034, %v1077
        %v1144 = vadd.f32 %v1035, %v1098
        %v1145 = vadd.f32 %v1036, %v1119
        %v1146 = vadd.f32 %v1037, %v1140
        %v1147 = vrcp.pop %v1050
        %v1148 = vrcp.pop %v1051
        %v1149 = vrcp.pop %v1052
        %v1150 = vrcp.pop %v1053
        %v1151 = vmul.f32 %v1143, %v1147
        %v1152 = vmul.f32 %v1144, %v1148
        %v1153 = vmul.f32 %v1145, %v1149
        %v1154 = vmul.f32 %v1146, %v1150
        %1156 = vrot.lane.b32.xlu0 %v1152, 8
        %v1157 = vpop.permute.xlu0 %1156
        %1160 = vrot.lane.b32.xlu0 %v1153, 16
        %v1161 = vpop.permute.xlu0 %1160
        %1164 = vrot.lane.b32.xlu0 %v1154, 24
        %v1165 = vpop.permute.xlu0 %1164
        %v1167 = vsel %vm902, %v1151, %v1157
        %vm1168 = vcmask 130048
        %v1169 = vsel %vm1168, %v1167, %v1161
        %vm1170 = vcmask 195584
        %v1171 = vsel %vm1170, %v1169, %v1165
        %1173 = vrot.lane.b32.xlu0 %v867, 120
        %v1174 = vpop.permute.xlu0 %1173
        %1176 = vrot.lane.b32.xlu0 %v867, 112
        %v1177 = vpop.permute.xlu0 %1176
        %1179 = vrot.lane.b32.xlu0 %v867, 104
        %v1180 = vpop.permute.xlu0 %1179
        %v1182 = vpack.c.bf16 %v867, %v867
        %v1183 = vpack.c.bf16 %v1174, %v1174
        %v1184 = vpack.c.bf16 %v1177, %v1177
        %v1185 = vpack.c.bf16 %v1180, %v1180
        %1187 = vrot.lane.b32.xlu0 %v864, 120
        %v1188 = vpop.permute.xlu0 %1187
        %1190 = vrot.lane.b32.xlu0 %v864, 112
        %v1191 = vpop.permute.xlu0 %1190
        %1193 = vrot.lane.b32.xlu0 %v864, 104
        %v1194 = vpop.permute.xlu0 %1193
        %v1196 = vpack.c.bf16 %v864, %v864
        %v1197 = vpack.c.bf16 %v1188, %v1188
        %v1198 = vpack.c.bf16 %v1191, %v1191
        %v1199 = vpack.c.bf16 %v1194, %v1194
        %v1201 = vunpack.c.l.b16 %v1196
        %v1202 = vpack.c.b16 %v1201, %v1201
        %1203 = vrot.lane.b32.xlu0 %v1202, 96
        %v1204 = vpop.permute.xlu0 %1203
        %v1206 = vsel %vm902, %v1182, 0
        %v1209 = vsel %vm902, %v1204, 0
        %1211 = vmatpush.bf16.xpose.msra.mxu0 0
        %1212 = vmatpush.bf16.xpose.msra.mxu0 0
        %1213 = vmatpush.bf16.xpose.msra.mxu0 0
        %1214 = vmatpush.bf16.xpose.msra.mxu0 0
        %1215 = vmatpush.bf16.xpose.msra.mxu0 0
        %1216 = vmatpush.bf16.xpose.msra.mxu0 0
        %1217 = vmatpush.bf16.xpose.msra.mxu0 0
        %1218 = vmatpush.bf16.xpose.msra.mxu0 %v1209
        %1219 = vmatmul.bf16.gmra.mxu0 %v1206
        %v1220 = vpop.f32.mrf.mxu0
        %v1221 = vadd.f32 %v868, %v1220
        %v1222 = vpop.f32.mrf.mxu0
        %1223 = vdwg.mxu0
        %v1225 = vunpack.c.l.b16 %v1197
        %v1226 = vpack.c.b16 %v1225, %v1225
        %1227 = vrot.lane.b32.xlu0 %v1226, 96
        %v1228 = vpop.permute.xlu0 %1227
        %v1230 = vsel %vm902, %v1183, 0
        %v1233 = vsel %vm902, %v1228, 0
        %1235 = vmatpush.bf16.xpose.msra.mxu0 0
        %1236 = vmatpush.bf16.xpose.msra.mxu0 0
        %1237 = vmatpush.bf16.xpose.msra.mxu0 0
        %1238 = vmatpush.bf16.xpose.msra.mxu0 0
        %1239 = vmatpush.bf16.xpose.msra.mxu0 0
        %1240 = vmatpush.bf16.xpose.msra.mxu0 0
        %1241 = vmatpush.bf16.xpose.msra.mxu0 0
        %1242 = vmatpush.bf16.xpose.msra.mxu0 %v1233
        %1243 = vmatmul.bf16.gmra.mxu0 %v1230
        %v1244 = vpop.f32.mrf.mxu0
        %v1245 = vadd.f32 %v868, %v1244
        %v1246 = vpop.f32.mrf.mxu0
        %1247 = vdwg.mxu0
        %v1249 = vunpack.c.l.b16 %v1198
        %v1250 = vpack.c.b16 %v1249, %v1249
        %1251 = vrot.lane.b32.xlu0 %v1250, 96
        %v1252 = vpop.permute.xlu0 %1251
        %v1254 = vsel %vm902, %v1184, 0
        %v1257 = vsel %vm902, %v1252, 0
        %1259 = vmatpush.bf16.xpose.msra.mxu0 0
        %1260 = vmatpush.bf16.xpose.msra.mxu0 0
        %1261 = vmatpush.bf16.xpose.msra.mxu0 0
        %1262 = vmatpush.bf16.xpose.msra.mxu0 0
        %1263 = vmatpush.bf16.xpose.msra.mxu0 0
        %1264 = vmatpush.bf16.xpose.msra.mxu0 0
        %1265 = vmatpush.bf16.xpose.msra.mxu0 0
        %1266 = vmatpush.bf16.xpose.msra.mxu0 %v1257
        %1267 = vmatmul.bf16.gmra.mxu0 %v1254
        %v1268 = vpop.f32.mrf.mxu0
        %v1269 = vadd.f32 %v868, %v1268
        %v1270 = vpop.f32.mrf.mxu0
        %1271 = vdwg.mxu0
        %v1273 = vunpack.c.l.b16 %v1199
        %v1274 = vpack.c.b16 %v1273, %v1273
        %1275 = vrot.lane.b32.xlu0 %v1274, 96
        %v1276 = vpop.permute.xlu0 %1275
        %v1278 = vsel %vm902, %v1185, 0
        %v1281 = vsel %vm902, %v1276, 0
        %1283 = vmatpush.bf16.xpose.msra.mxu0 0
        %1284 = vmatpush.bf16.xpose.msra.mxu0 0
        %1285 = vmatpush.bf16.xpose.msra.mxu0 0
        %1286 = vmatpush.bf16.xpose.msra.mxu0 0
        %1287 = vmatpush.bf16.xpose.msra.mxu0 0
        %1288 = vmatpush.bf16.xpose.msra.mxu0 0
        %1289 = vmatpush.bf16.xpose.msra.mxu0 0
        %1290 = vmatpush.bf16.xpose.msra.mxu0 %v1281
        %1291 = vmatmul.bf16.gmra.mxu0 %v1278
        %v1292 = vpop.f32.mrf.mxu0
        %v1293 = vadd.f32 %v868, %v1292
        %v1294 = vpop.f32.mrf.mxu0
        %1295 = vdwg.mxu0
        %v1296 = vsel %vm902, %v1221, -inf
        %1297 = vmax.xlane.f32.xlu0 %v1296
        %v1298 = vpop.xlane.xlu0 %1297
        %v1299 = vsel %vm902, %v1245, -inf
        %1300 = vmax.xlane.f32.xlu0 %v1299
        %v1301 = vpop.xlane.xlu0 %1300
        %v1302 = vsel %vm902, %v1269, -inf
        %1303 = vmax.xlane.f32.xlu0 %v1302
        %v1304 = vpop.xlane.xlu0 %1303
        %v1305 = vsel %vm902, %v1293, -inf
        %1306 = vmax.xlane.f32.xlu0 %v1305
        %v1307 = vpop.xlane.xlu0 %1306
        %v1308 = vmax.f32 %v1298, -1e+30
        %v1309 = vmax.f32 %v1301, -1e+30
        %v1310 = vmax.f32 %v1304, -1e+30
        %v1311 = vmax.f32 %v1307, -1e+30
        %v1312 = vsub.f32 -1e+30, %v1308
        %v1313 = vsub.f32 -1e+30, %v1309
        %v1314 = vsub.f32 -1e+30, %v1310
        %v1315 = vsub.f32 -1e+30, %v1311
        %v1316 = vmul.f32 %v1312, 1.442695
        %v1317 = vpow.pop %v1316
        %v1318 = vmul.f32 %v1313, 1.442695
        %v1319 = vpow.pop %v1318
        %v1320 = vmul.f32 %v1314, 1.442695
        %v1321 = vpow.pop %v1320
        %v1322 = vmul.f32 %v1315, 1.442695
        %v1323 = vpow.pop %v1322
        %v1324 = vsub.f32 %v1221, %v1308
        %v1325 = vsub.f32 %v1245, %v1309
        %v1326 = vsub.f32 %v1269, %v1310
        %v1327 = vsub.f32 %v1293, %v1311
        %v1328 = vmul.f32 %v1324, 1.442695
        %v1329 = vpow.pop %v1328
        %v1330 = vmul.f32 %v1325, 1.442695
        %v1331 = vpow.pop %v1330
        %v1332 = vmul.f32 %v1326, 1.442695
        %v1333 = vpow.pop %v1332
        %v1334 = vmul.f32 %v1327, 1.442695
        %v1335 = vpow.pop %v1334
        %v1336 = vmul.f32 %v1317, 0.0
        %v1337 = vmul.f32 %v1319, 0.0
        %v1338 = vmul.f32 %v1321, 0.0
        %v1339 = vmul.f32 %v1323, 0.0
        %v1340 = vsel %vm902, %v1329, 0.0
        %1341 = vadd.xlane.f32.xlu0 %v1340
        %v1342 = vpop.xlane.xlu0 %1341
        %v1343 = vsel %vm902, %v1331, 0.0
        %1344 = vadd.xlane.f32.xlu0 %v1343
        %v1345 = vpop.xlane.xlu0 %1344
        %v1346 = vsel %vm902, %v1333, 0.0
        %1347 = vadd.xlane.f32.xlu0 %v1346
        %v1348 = vpop.xlane.xlu0 %1347
        %v1349 = vsel %vm902, %v1335, 0.0
        %1350 = vadd.xlane.f32.xlu0 %v1349
        %v1351 = vpop.xlane.xlu0 %1350
        %v1352 = vadd.f32 %v1336, %v1342
        %v1353 = vadd.f32 %v1337, %v1345
        %v1354 = vadd.f32 %v1338, %v1348
        %v1355 = vadd.f32 %v1339, %v1351
        %v1356 = vpack.c.bf16 %v1329, %v1329
        %v1357 = vpack.c.bf16 %v1331, %v1331
        %v1358 = vpack.c.bf16 %v1333, %v1333
        %v1359 = vpack.c.bf16 %v1335, %v1335
        %1360 = vrot.lane.b32.xlu0 %v1202, 64
        %v1361 = vpop.permute.xlu0 %1360
        %v1363 = vsel %vm902, %v1356, 0
        %v1366 = vsel %vm1063, %v1361, 0
        %1368 = vmatpush.bf16.msra.mxu0 0
        %1369 = vmatpush.bf16.msra.mxu0 0
        %1370 = vmatpush.bf16.msra.mxu0 0
        %1371 = vmatpush.bf16.msra.mxu0 0
        %1372 = vmatpush.bf16.msra.mxu0 0
        %1373 = vmatpush.bf16.msra.mxu0 0
        %1374 = vmatpush.bf16.msra.mxu0 0
        %1375 = vmatpush.bf16.msra.mxu0 %v1366
        %1376 = vmatmul.bf16.gmra.mxu0 %v1363
        %v1377 = vpop.f32.mrf.mxu0
        %v1378 = vadd.f32 0.0, %v1377
        %v1379 = vpop.f32.mrf.mxu0
        %1380 = vdwg.mxu0
        %1381 = vrot.lane.b32.xlu0 %v1226, 64
        %v1382 = vpop.permute.xlu0 %1381
        %v1384 = vsel %vm902, %v1357, 0
        %v1387 = vsel %vm1063, %v1382, 0
        %1389 = vmatpush.bf16.msra.mxu0 0
        %1390 = vmatpush.bf16.msra.mxu0 0
        %1391 = vmatpush.bf16.msra.mxu0 0
        %1392 = vmatpush.bf16.msra.mxu0 0
        %1393 = vmatpush.bf16.msra.mxu0 0
        %1394 = vmatpush.bf16.msra.mxu0 0
        %1395 = vmatpush.bf16.msra.mxu0 0
        %1396 = vmatpush.bf16.msra.mxu0 %v1387
        %1397 = vmatmul.bf16.gmra.mxu0 %v1384
        %v1398 = vpop.f32.mrf.mxu0
        %v1399 = vadd.f32 0.0, %v1398
        %v1400 = vpop.f32.mrf.mxu0
        %1401 = vdwg.mxu0
        %1402 = vrot.lane.b32.xlu0 %v1250, 64
        %v1403 = vpop.permute.xlu0 %1402
        %v1405 = vsel %vm902, %v1358, 0
        %v1408 = vsel %vm1063, %v1403, 0
        %1410 = vmatpush.bf16.msra.mxu0 0
        %1411 = vmatpush.bf16.msra.mxu0 0
        %1412 = vmatpush.bf16.msra.mxu0 0
        %1413 = vmatpush.bf16.msra.mxu0 0
        %1414 = vmatpush.bf16.msra.mxu0 0
        %1415 = vmatpush.bf16.msra.mxu0 0
        %1416 = vmatpush.bf16.msra.mxu0 0
        %1417 = vmatpush.bf16.msra.mxu0 %v1408
        %1418 = vmatmul.bf16.gmra.mxu0 %v1405
        %v1419 = vpop.f32.mrf.mxu0
        %v1420 = vadd.f32 0.0, %v1419
        %v1421 = vpop.f32.mrf.mxu0
        %1422 = vdwg.mxu0
        %1423 = vrot.lane.b32.xlu0 %v1274, 64
        %v1424 = vpop.permute.xlu0 %1423
        %v1426 = vsel %vm902, %v1359, 0
        %v1429 = vsel %vm1063, %v1424, 0
        %1431 = vmatpush.bf16.msra.mxu0 0
        %1432 = vmatpush.bf16.msra.mxu0 0
        %1433 = vmatpush.bf16.msra.mxu0 0
        %1434 = vmatpush.bf16.msra.mxu0 0
        %1435 = vmatpush.bf16.msra.mxu0 0
        %1436 = vmatpush.bf16.msra.mxu0 0
        %1437 = vmatpush.bf16.msra.mxu0 0
        %1438 = vmatpush.bf16.msra.mxu0 %v1429
        %1439 = vmatmul.bf16.gmra.mxu0 %v1426
        %v1440 = vpop.f32.mrf.mxu0
        %v1441 = vadd.f32 0.0, %v1440
        %v1442 = vpop.f32.mrf.mxu0
        %1443 = vdwg.mxu0
        %v1444 = vadd.f32 %v1336, %v1378
        %v1445 = vadd.f32 %v1337, %v1399
        %v1446 = vadd.f32 %v1338, %v1420
        %v1447 = vadd.f32 %v1339, %v1441
        %v1448 = vrcp.pop %v1352
        %v1449 = vrcp.pop %v1353
        %v1450 = vrcp.pop %v1354
        %v1451 = vrcp.pop %v1355
        %v1452 = vmul.f32 %v1444, %v1448
        %v1453 = vmul.f32 %v1445, %v1449
        %v1454 = vmul.f32 %v1446, %v1450
        %v1455 = vmul.f32 %v1447, %v1451
        %1457 = vrot.lane.b32.xlu0 %v1453, 8
        %v1458 = vpop.permute.xlu0 %1457
        %1461 = vrot.lane.b32.xlu0 %v1454, 16
        %v1462 = vpop.permute.xlu0 %1461
        %1465 = vrot.lane.b32.xlu0 %v1455, 24
        %v1466 = vpop.permute.xlu0 %1465
        %v1468 = vsel %vm902, %v1452, %v1458
        %v1469 = vsel %vm1168, %v1468, %v1462
        %v1470 = vsel %vm1170, %v1469, %v1466
        %v1471 = vpack.c.bf16 %v1470, %v1171
        %v1472 = vld [vmem:[%s720] sm:$0xf]
        %v1473 = vld [vmem:[%s720 + $0x4] sm:$0xf]
        %v1474 = vld [vmem:[%s720 + $0x8] sm:$0xf]
        %v1475 = vld [vmem:[%s720 + $0xc] sm:$0xf]
        %v1476 = vld [vmem:[%s723] sm:$0x1]
        %v1478 = vperm.slane %v1476, 0
        %v1484 = vunpack.c.l.b16 %v1472
        %v1485 = vunpack.c.l.b16 %v1473
        %v1486 = vunpack.c.l.b16 %v1474
        %v1487 = vunpack.c.l.b16 %v1475
        %v1488 = vpack.c.b16 %v1485, %v1484
        %v1489 = vpack.c.b16 %v1487, %v1486
        %v1493 = vsel %vm766, %v1471, 0
        %1495 = vmatpush.bf16.msra.mxu0 0
        %1496 = vmatpush.bf16.msra.mxu0 0
        %1497 = vmatpush.bf16.msra.mxu0 0
        %1498 = vmatpush.bf16.msra.mxu0 0
        %1499 = vmatpush.bf16.msra.mxu0 0
        %1500 = vmatpush.bf16.msra.mxu0 0
        %1501 = vmatpush.bf16.msra.mxu0 %v1489
        %1502 = vmatpush.bf16.msra.mxu0 %v1488
        %1503 = vmatmul.bf16.gmra.mxu0 %v1493
        %v1504 = vpop.f32.mrf.mxu0
        %v1505 = vadd.f32 %v1478, %v1504
        %v1506 = vpop.f32.mrf.mxu0
        %v1507 = vadd.f32 %v1478, %v1506
        %1508 = vdwg.mxu0
        %v1509 = vadd.f32 %v762, %v1505
        %v1510 = vadd.f32 %v763, %v1507
        %v1511 = vld [vmem:[%s726] sm:$0x1]
        %v1512 = vld [vmem:[%s729] sm:$0x1]
        %v1513 = vsel %vm766, %v1509, 0.0
        %1514 = vadd.xlane.f32.xlu0 %v1513
        %v1515 = vpop.xlane.xlu0 %1514
        %v1516 = vsel %vm766, %v1510, 0.0
        %1517 = vadd.xlane.f32.xlu0 %v1516
        %v1518 = vpop.xlane.xlu0 %1517
        %v1519 = vmul.f32 %v1515, %v779
        %v1520 = vmul.f32 %v1518, %v779
        %v1521 = vsub.f32 %v1509, %v1519
        %v1522 = vsub.f32 %v1510, %v1520
        %v1523 = vmul.f32 %v1521, %v1521
        %v1524 = vmul.f32 %v1522, %v1522
        %v1525 = vsel %vm766, %v1523, 0.0
        %1526 = vadd.xlane.f32.xlu0 %v1525
        %v1527 = vpop.xlane.xlu0 %1526
        %v1528 = vsel %vm766, %v1524, 0.0
        %1529 = vadd.xlane.f32.xlu0 %v1528
        %v1530 = vpop.xlane.xlu0 %1529
        %v1531 = vmul.f32 %v1527, %v779
        %v1532 = vmul.f32 %v1530, %v779
        %v1533 = vadd.f32 %v1531, 1e-05
        %v1534 = vadd.f32 %v1532, 1e-05
        %v1535 = vrsqrt.pop %v1533
        %v1536 = vmul.f32 %v1535, %v1533
        %v1537 = vmul.f32 %v1536, %v1535
        %v1538 = vmul.f32 0.5, %v1537
        %v1539 = vsub.f32 1.5, %v1538
        %v1540 = vmul.f32 %v1535, %v1539
        %vm1541 = vweird.f32 %v1533
        %vm1542 = vweird.f32 %v1535
        %vm1543 = vmor %vm1541, %vm1542
        %v1544 = vsel %vm1543, %v1535, %v1540
        %v1545 = vrsqrt.pop %v1534
        %v1546 = vmul.f32 %v1545, %v1534
        %v1547 = vmul.f32 %v1546, %v1545
        %v1548 = vmul.f32 0.5, %v1547
        %v1549 = vsub.f32 1.5, %v1548
        %v1550 = vmul.f32 %v1545, %v1549
        %vm1551 = vweird.f32 %v1534
        %vm1552 = vweird.f32 %v1545
        %vm1553 = vmor %vm1551, %vm1552
        %v1554 = vsel %vm1553, %v1545, %v1550
        %v1555 = vmul.f32 %v1521, %v1544
        %v1556 = vmul.f32 %v1522, %v1554
        %v1558 = vperm.slane %v1511, 0
        %v1560 = vmul.f32 %v1555, %v1558
        %v1561 = vmul.f32 %v1556, %v1558
        %v1563 = vperm.slane %v1512, 0
        %v1565 = vadd.f32 %v1560, %v1563
        %v1566 = vadd.f32 %v1561, %v1563
        %v1567 = vpack.c.bf16 %v1566, %v1565
        %v1568 = vld [vmem:[%s734] sm:$0xf]
        %v1569 = vld [vmem:[%s734 + $0x4] sm:$0xf]
        %v1570 = vld [vmem:[%s734 + $0x8] sm:$0xf]
        %v1571 = vld [vmem:[%s734 + $0xc] sm:$0xf]
        %v1572 = vld [vmem:[%s742] sm:$0xf]
        %v1573 = vld [vmem:[%s742 + $0x4] sm:$0xf]
        %v1574 = vld [vmem:[%s742 + $0x8] sm:$0xf]
        %v1575 = vld [vmem:[%s742 + $0xc] sm:$0xf]
        %v1576 = vld [vmem:[%s742 + $0x10] sm:$0xf]
        %v1577 = vld [vmem:[%s742 + $0x14] sm:$0xf]
        %v1578 = vld [vmem:[%s742 + $0x18] sm:$0xf]
        %v1579 = vld [vmem:[%s742 + $0x1c] sm:$0xf]
        %v1580 = vld [vmem:[%s742 + $0x20] sm:$0xf]
        %v1581 = vld [vmem:[%s742 + $0x24] sm:$0xf]
        %v1582 = vld [vmem:[%s742 + $0x28] sm:$0xf]
        %v1583 = vld [vmem:[%s742 + $0x2c] sm:$0xf]
        %v1584 = vld [vmem:[%s742 + $0x30] sm:$0xf]
        %v1585 = vld [vmem:[%s742 + $0x34] sm:$0xf]
        %v1586 = vld [vmem:[%s742 + $0x38] sm:$0xf]
        %v1587 = vld [vmem:[%s742 + $0x3c] sm:$0xf]
        %v1588 = vld [vmem:[%s737] sm:$0x1]
        %v1590 = vperm.slane %v1588, 0
        %v1596 = vunpack.c.l.b16 %v1568
        %v1597 = vunpack.c.l.b16 %v1569
        %v1598 = vunpack.c.l.b16 %v1570
        %v1599 = vunpack.c.l.b16 %v1571
        %v1600 = vpack.c.b16 %v1597, %v1596
        %v1601 = vpack.c.b16 %v1599, %v1598
        %v1605 = vsel %vm766, %v1567, 0
        %1607 = vmatpush.bf16.msra.mxu0 0
        %1608 = vmatpush.bf16.msra.mxu0 0
        %1609 = vmatpush.bf16.msra.mxu0 0
        %1610 = vmatpush.bf16.msra.mxu0 0
        %1611 = vmatpush.bf16.msra.mxu0 0
        %1612 = vmatpush.bf16.msra.mxu0 0
        %1613 = vmatpush.bf16.msra.mxu0 %v1601
        %1614 = vmatpush.bf16.msra.mxu0 %v1600
        %1615 = vmatmul.bf16.gmra.mxu0 %v1605
        %v1616 = vpop.f32.mrf.mxu0
        %v1617 = vadd.f32 %v1590, %v1616
        %v1618 = vpop.f32.mrf.mxu0
        %v1619 = vadd.f32 %v1590, %v1618
        %1620 = vdwg.mxu0
        %v1621 = vmul.f32 %v1617, 0.5
        %v1622 = vmul.f32 %v1619, 0.5
        %v1623 = vmul.f32 %v1617, 0.044715
        %v1624 = vmul.f32 %v1619, 0.044715
        %v1625 = vmul.f32 %v1623, %v1617
        %v1626 = vmul.f32 %v1624, %v1619
        %v1627 = vmul.f32 %v1625, %v1617
        %v1628 = vmul.f32 %v1626, %v1619
        %v1629 = vadd.f32 %v1617, %v1627
        %v1630 = vadd.f32 %v1619, %v1628
        %v1631 = vmul.f32 %v1629, 0.7978846
        %v1632 = vmul.f32 %v1630, 0.7978846
        %v1633 = vtanh.pop %v1631
        %v1634 = vtanh.pop %v1632
        %v1635 = vadd.f32 %v1633, 1.0
        %v1636 = vadd.f32 %v1634, 1.0
        %v1637 = vmul.f32 %v1621, %v1635
        %v1638 = vmul.f32 %v1622, %v1636
        %v1639 = vpack.c.bf16 %v1638, %v1637
        %v1656 = vunpack.c.l.b16 %v1572
        %v1657 = vunpack.c.l.b16 %v1573
        %v1658 = vunpack.c.l.b16 %v1574
        %v1659 = vunpack.c.l.b16 %v1575
        %v1660 = vunpack.c.l.b16 %v1576
        %v1661 = vunpack.c.l.b16 %v1577
        %v1662 = vunpack.c.l.b16 %v1578
        %v1663 = vunpack.c.l.b16 %v1579
        %v1664 = vunpack.c.l.b16 %v1580
        %v1665 = vunpack.c.l.b16 %v1581
        %v1666 = vunpack.c.l.b16 %v1582
        %v1667 = vunpack.c.l.b16 %v1583
        %v1668 = vunpack.c.l.b16 %v1584
        %v1669 = vunpack.c.l.b16 %v1585
        %v1670 = vunpack.c.l.b16 %v1586
        %v1671 = vunpack.c.l.b16 %v1587
        %v1672 = vpack.c.b16 %v1657, %v1656
        %v1673 = vpack.c.b16 %v1659, %v1658
        %v1674 = vpack.c.b16 %v1661, %v1660
        %v1675 = vpack.c.b16 %v1663, %v1662
        %v1676 = vpack.c.b16 %v1665, %v1664
        %v1677 = vpack.c.b16 %v1667, %v1666
        %v1678 = vpack.c.b16 %v1669, %v1668
        %v1679 = vpack.c.b16 %v1671, %v1670
        %1688 = vmatpush.bf16.msra.mxu0 %v1679
        %1689 = vmatpush.bf16.msra.mxu0 %v1678
        %1690 = vmatpush.bf16.msra.mxu0 %v1677
        %1691 = vmatpush.bf16.msra.mxu0 %v1676
        %1692 = vmatpush.bf16.msra.mxu0 %v1675
        %1693 = vmatpush.bf16.msra.mxu0 %v1674
        %1694 = vmatpush.bf16.msra.mxu0 %v1673
        %1695 = vmatpush.bf16.msra.mxu0 %v1672
        %1696 = vmatmul.bf16.gmra.mxu0 %v1639
        %v1697 = vpop.f32.mrf.mxu0
        %v1698 = vadd.f32 0.0, %v1697
        %v1699 = vpop.f32.mrf.mxu0
        %v1700 = vadd.f32 0.0, %v1699
        %1701 = vdwg.mxu0
        %v1702 = vadd.f32 %v1509, %v1698
        %v1703 = vadd.f32 %v1510, %v1700
        %v1704 = vld [vmem:[%s745] sm:$0x1]
        %v1706 = vperm.slane %v1704, 0
        %v1708 = vadd.f32 %v1702, %v1706
        %v1709 = vadd.f32 %v1703, %v1706
        %1710 = vst.msk [vmem:[#allocation2] sm:$0xff] %vm766, %v1708
        %1711 = vst.msk [vmem:[#allocation2 + $0x8] sm:$0xff] %vm766, %v1709
        %p1712 = scmp.eq.s32.totalorder %s34, 1
        // Predicated region
        $region93: #{tpu_custom_call.1} parent=87 // pred_check
          %p1713 = pneg %p1712
        $region94: #{tpu_custom_call.1} parent=87 // pred_check_branch
          %1715 = sbr.rel (%p1713) target = $region96
        $region95: #{tpu_custom_call.1} parent=87 // pred_region
          %v1716 = vld [vmem:[%s15] sm:$0x1]
          %v1717 = vld [vmem:[%s16] sm:$0x1]
          %v1718 = vsel %vm766, %v1708, 0.0
          %1719 = vadd.xlane.f32.xlu0 %v1718
          %v1720 = vpop.xlane.xlu0 %1719
          %v1721 = vsel %vm766, %v1709, 0.0
          %1722 = vadd.xlane.f32.xlu0 %v1721
          %v1723 = vpop.xlane.xlu0 %1722
          %v1724 = vmul.f32 %v1720, %v779
          %v1725 = vmul.f32 %v1723, %v779
          %v1726 = vsub.f32 %v1708, %v1724
          %v1727 = vsub.f32 %v1709, %v1725
          %v1728 = vmul.f32 %v1726, %v1726
          %v1729 = vmul.f32 %v1727, %v1727
          %v1730 = vsel %vm766, %v1728, 0.0
          %1731 = vadd.xlane.f32.xlu0 %v1730
          %v1732 = vpop.xlane.xlu0 %1731
          %v1733 = vsel %vm766, %v1729, 0.0
          %1734 = vadd.xlane.f32.xlu0 %v1733
          %v1735 = vpop.xlane.xlu0 %1734
          %v1736 = vmul.f32 %v1732, %v779
          %v1737 = vmul.f32 %v1735, %v779
          %v1738 = vadd.f32 %v1736, 1e-05
          %v1739 = vadd.f32 %v1737, 1e-05
          %v1740 = vrsqrt.pop %v1738
          %v1741 = vmul.f32 %v1740, %v1738
          %v1742 = vmul.f32 %v1741, %v1740
          %v1743 = vmul.f32 0.5, %v1742
          %v1744 = vsub.f32 1.5, %v1743
          %v1745 = vmul.f32 %v1740, %v1744
          %vm1746 = vweird.f32 %v1738
          %vm1747 = vweird.f32 %v1740
          %vm1748 = vmor %vm1746, %vm1747
          %v1749 = vsel %vm1748, %v1740, %v1745
          %v1750 = vrsqrt.pop %v1739
          %v1751 = vmul.f32 %v1750, %v1739
          %v1752 = vmul.f32 %v1751, %v1750
          %v1753 = vmul.f32 0.5, %v1752
          %v1754 = vsub.f32 1.5, %v1753
          %v1755 = vmul.f32 %v1750, %v1754
          %vm1756 = vweird.f32 %v1739
          %vm1757 = vweird.f32 %v1750
          %vm1758 = vmor %vm1756, %vm1757
          %v1759 = vsel %vm1758, %v1750, %v1755
          %v1760 = vmul.f32 %v1726, %v1749
          %v1761 = vmul.f32 %v1727, %v1759
          %v1763 = vperm.slane %v1716, 0
          %v1765 = vmul.f32 %v1760, %v1763
          %v1766 = vmul.f32 %v1761, %v1763
          %v1768 = vperm.slane %v1717, 0
          %v1770 = vadd.f32 %v1765, %v1768
          %v1771 = vadd.f32 %v1766, %v1768
          %1772 = vst.msk [vmem:[#allocation3] sm:$0xff] %vm766, %v1770
          %1773 = vst.msk [vmem:[#allocation3 + $0x8] sm:$0xff] %vm766, %v1771
        $region96: #{tpu_custom_call.1} parent=87 // pred_fallthru
          _
        // Predicated region
        $region97: #{tpu_custom_call.1} parent=87 // pred_check
          %p1774 = pneg %p481
        $region98: #{tpu_custom_call.1} parent=87 // pred_check_branch
          %1776 = sbr.rel (%p1774) target = $region100
        $region99: #{tpu_custom_call.1} parent=87 // pred_region
          %s1777 = smul.u32 2, %s33
          %1779 = vsyncadd [#allocation4], 0
          %s1780 = smul.addr %s1777, 8
          %s1781 = scalar_lea.hbm %s17, %s1780
          %s1782 = sshll.u32 [#allocation3], 4
          %s1783 = int_to_ptr.vmem [resolvable:$true] %s1782
          %s1784 = sshll.u32 %s1781, 4
          %s1785 = int_to_ptr.hbm [resolvable:$true] %s1784
          %1790 = dma.vmem_to_hbm [thread:$0]  %s1783, 256, %s1785, [#allocation4], 128, 128, 8
        $region100: #{tpu_custom_call.1} parent=87 // pred_fallthru
          _
        // Predicated region
        $region101: #{tpu_custom_call.1} parent=87 // pred_check
          %p1791 = pneg %p481
        $region102: #{tpu_custom_call.1} parent=87 // pred_check_branch
          %1793 = sbr.rel (%p1791) target = $region104
        $region103: #{tpu_custom_call.1} parent=87 // pred_region
          %1795 = dma.done [#allocation4], 256
        $region104: #{tpu_custom_call.1} parent=87 // pred_fallthru
          _
      $region88: #{tpu_custom_call.1} parent=5 // pred_fallthru
        _
      %p1796 = scmp.le.s32.totalorder 2, %s24
      // Predicated region
      $region105: #{tpu_custom_call.1} parent=5 // pred_check
        %p1797 = pneg %p1796
      $region106: #{tpu_custom_call.1} parent=5 // pred_check_branch
        %1799 = sbr.rel (%p1797) target = $region108
      $region107: #{tpu_custom_call.1} parent=5 // pred_region
        %s1800 = ssub.s32 %s24, 2
      $region108: #{tpu_custom_call.1} parent=5 // pred_fallthru
        _
    $region6: #{tpu_custom_call.1} parent=1 // loop_footer
      %s28 = sadd.s32 1, %s24
    $region7: #{tpu_custom_call.1} parent=1 // loop_footer_branch
      %23 = sbr.rel target = $region3
    $region8: #{tpu_custom_call.1} parent=1 // loop_exit
      _
    %1801 = vsyncpa [#allocation4], 1
    %s1802 = scalar_lea.sflag [#allocation4], 1
    %1803 = vsyncpa %s1802, 1

</llo_original>
